<compile_context>
chip_gen: v6e
topology: v6e:2x2x1
jax: 0.10.0
libtpu: 0.0.40
codegen_flags: <defaults>
</compile_context>

<pallas_src>
import jax
import jax.numpy as jnp
from jax.experimental import pallas as pl
from jax.experimental.pallas import tpu as pltpu

# ----- small model configuration ------------------------------------------
BATCH = 2
N_AGENTS = 2
ACTION_SIZE = 8
N_CATEGORICALS = 4
N_CLASSES = 8
STOCHASTIC = N_CATEGORICALS * N_CLASSES      # 32
DETERMINISTIC = 32
HIDDEN = 32                                  # transition hidden_size AND config.HIDDEN
EMBED = 24
ROWS = BATCH * N_AGENTS                      # 4 valid rows

IN_RI = ACTION_SIZE + STOCHASTIC             # 40  (rnn_input_model fan-in)
IN_Q1 = DETERMINISTIC + EMBED                # 56  (posterior head fan-in)

# ----- packed parameter layout (all row offsets multiples of 16 for bf16) ---
R_WRI = 0        # [40, 32]  rnn-input Linear
R_WFC = 48       # [32, 32]  _fc Linear
R_WIH = 80       # [32, 96]  GRU W_ih (gate order r|z|n along lanes)
R_WHH = 112      # [32, 96]  GRU W_hh
R_W1F = 144      # [56, 64]  fused head layer-1: [h|e] -> [hp|hq]
R_W2F = 208      # [64, 64]  block-diagonal head layer-2 -> [prior|post] logits
MAT_ROWS = 272
# bias slab (f32, [8, 128]); one bias per row, lane offset 0
B_RI, B_FC, B_IH, B_HH, B_1F, B_2F = 0, 1, 2, 3, 4, 5

# per-timestep packed input lanes: [actions | embed | gumbel(2S) | pad] = 128
L_ACT, L_EMB, L_GUM = 0, ACTION_SIZE, ACTION_SIZE + EMBED
IN_LANES = 128
# per-timestep output lanes:
# [prior_logits | post_logits | deter | prior_stoch | post_stoch | pad] = 256
OUT_LANES = 256


def _rssm_rollout_kernel(inp_ref, init_ref, wm_ref, wb_ref, out_ref, state_ref):
    f32 = jnp.float32
    H, D, S, E, A = HIDDEN, DETERMINISTIC, STOCHASTIC, EMBED, ACTION_SIZE
    rows = inp_ref.shape[0]

    # t == 0: load the externally provided prev_state into the VMEM carry.
    @pl.when(pl.program_id(0) == 0)
    def _():
        state_ref[...] = init_ref[...]

    def mm(a, w):                       # bf16 MXU operands, f32 accumulation
        return jnp.dot(a.astype(jnp.bfloat16), w, preferred_element_type=f32)

    inp = inp_ref[...]                                   # [rows, 128]
    actions = inp[:, L_ACT:L_ACT + A]                    # [rows, 8]
    embed = inp[:, L_EMB:L_EMB + E]                      # [rows, 24]
    gumbel = inp[:, L_GUM:L_GUM + 2 * S]                 # [rows, 64]

    state = state_ref[...]                               # [rows, 64]
    stoch_prev = state[:, 0:S]
    h_prev = state[:, S:S + D]

    # _rnn_input_model: ReLU(Linear(cat([prev_actions, prev_stoch])))
    x = jnp.maximum(
        mm(jnp.concatenate([actions, stoch_prev], axis=-1),
           wm_ref[R_WRI:R_WRI + IN_RI, 0:H]) + wb_ref[B_RI:B_RI + 1, 0:H], 0.0)
    # _fc (build_model, n_fc=1): ReLU(Linear(x))
    attn = jnp.maximum(mm(x, wm_ref[R_WFC:R_WFC + H, 0:H])
                       + wb_ref[B_FC:B_FC + 1, 0:H], 0.0)

    # single-step nn.GRU with gates fused into two [*, 3D] matmuls ([r|z|n]).
    gi = mm(attn, wm_ref[R_WIH:R_WIH + H, 0:3 * D]) + wb_ref[B_IH:B_IH + 1, 0:3 * D]
    gh = mm(h_prev, wm_ref[R_WHH:R_WHH + D, 0:3 * D]) + wb_ref[B_HH:B_HH + 1, 0:3 * D]
    r = jax.nn.sigmoid(gi[:, 0:D] + gh[:, 0:D])
    z = jax.nn.sigmoid(gi[:, D:2 * D] + gh[:, D:2 * D])
    n = jnp.tanh(gi[:, 2 * D:3 * D] + r * gh[:, 2 * D:3 * D])
    h = (1.0 - z) * n + z * h_prev                       # deter state

    # DiscreteLatentDist prior+posterior, fused with block-structured weights.
    # layer-1: [h|e] @ [wp1(+zero pad) | wq1] -> [hp|hq]
    h1 = jnp.maximum(
        mm(jnp.concatenate([h, embed], axis=-1), wm_ref[R_W1F:R_W1F + IN_Q1, 0:2 * H])
        + wb_ref[B_1F:B_1F + 1, 0:2 * H], 0.0)            # [rows, 64]
    # layer-2: block-diagonal RHS -> [prior_logits | post_logits] side by side
    logits = mm(h1, wm_ref[R_W2F:R_W2F + 2 * H, 0:2 * S]) + wb_ref[B_2F:B_2F + 1, 0:2 * S]

    # OneHotCategorical sampling via Gumbel-max over 8 lane groups
    # (4 prior + 4 posterior categoricals, 8 classes each).
    y = logits + gumbel
    col = jax.lax.broadcasted_iota(jnp.int32, y.shape, 1)
    one_hot = jnp.zeros_like(y)
    for c in range(2 * N_CATEGORICALS):                   # static, unrolled
        mask = (col >= c * N_CLASSES) & (col < (c + 1) * N_CLASSES)
        yc = jnp.where(mask, y, f32(-1e30))
        ym = jnp.max(yc, axis=-1, keepdims=True)
        # first-index tie-break (same convention as argmax); keeps strict one-hot
        idx = jnp.min(jnp.where((yc >= ym) & mask, col, 2 * S), axis=-1, keepdims=True)
        one_hot = one_hot + (col == idx).astype(f32)

    # carry: posterior stochastic sample + new deter (RSSM representation rollout)
    state_ref[...] = jnp.concatenate([one_hot[:, S:2 * S], h], axis=-1)

    # TODO(synk): straight-through term (one_hot + probs - probs.detach()) is an
    # identity in the forward pass; gradients need a custom_vjp around the call.
    pad = jnp.zeros((rows, OUT_LANES - (4 * S + D)), f32)
    out_ref[...] = jnp.concatenate([logits, h, one_hot, pad], axis=-1)


# ----- parameter handling ---------------------------------------------------
def init_params(key):
    def lin(k, fan_in, fan_out):
        k1, k2 = jax.random.split(k)
        bound = 1.0 / jnp.sqrt(jnp.float32(fan_in))
        w = jax.random.uniform(k1, (fan_in, fan_out), jnp.float32, -bound, bound)
        b = jax.random.uniform(k2, (1, fan_out), jnp.float32, -bound, bound)
        return w, b

    keys = jax.random.split(key, 8)
    D = DETERMINISTIC
    p = {}
    p["w_ri"], p["b_ri"] = lin(keys[0], IN_RI, HIDDEN)
    p["w_fc"], p["b_fc"] = lin(keys[1], HIDDEN, HIDDEN)
    bound = 1.0 / jnp.sqrt(jnp.float32(D))
    kih, khh, kbi, kbh = jax.random.split(keys[2], 4)
    p["w_ih"] = jax.random.uniform(kih, (HIDDEN, 3 * D), jnp.float32, -bound, bound)
    p["w_hh"] = jax.random.uniform(khh, (D, 3 * D), jnp.float32, -bound, bound)
    p["b_ih"] = jax.random.uniform(kbi, (1, 3 * D), jnp.float32, -bound, bound)
    p["b_hh"] = jax.random.uniform(kbh, (1, 3 * D), jnp.float32, -bound, bound)
    p["wp1"], p["bp1"] = lin(keys[3], D, HIDDEN)
    p["wp2"], p["bp2"] = lin(keys[4], HIDDEN, STOCHASTIC)
    p["wq1"], p["bq1"] = lin(keys[5], IN_Q1, HIDDEN)
    p["wq2"], p["bq2"] = lin(keys[6], HIDDEN, STOCHASTIC)
    return p


def pack_params(p):
    """Pack all matrices into one 16-aligned bf16 slab and all biases into one f32 slab."""
    mat = jnp.zeros((MAT_ROWS, 128), jnp.float32)

    def put(m, r, w):
        return m.at[r:r + w.shape[0], 0:w.shape[1]].set(w)

    mat = put(mat, R_WRI, p["w_ri"])
    mat = put(mat, R_WFC, p["w_fc"])
    mat = put(mat, R_WIH, p["w_ih"])
    mat = put(mat, R_WHH, p["w_hh"])
    # fused head layer-1: rows = [h(32) ; e(24)], cols = [hp(32) | hq(32)]
    w1f = jnp.zeros((IN_Q1, 2 * HIDDEN), jnp.float32)
    w1f = w1f.at[0:DETERMINISTIC, 0:HIDDEN].set(p["wp1"])
    w1f = w1f.at[:, HIDDEN:2 * HIDDEN].set(p["wq1"])
    mat = put(mat, R_W1F, w1f)
    # block-diagonal head layer-2
    w2f = jnp.zeros((2 * HIDDEN, 2 * STOCHASTIC), jnp.float32)
    w2f = w2f.at[0:HIDDEN, 0:STOCHASTIC].set(p["wp2"])
    w2f = w2f.at[HIDDEN:, STOCHASTIC:].set(p["wq2"])
    mat = put(mat, R_W2F, w2f)

    bias = jnp.zeros((8, 128), jnp.float32)

    def putb(b, r, v):
        v = v.reshape(1, -1)
        return b.at[r:r + 1, 0:v.shape[1]].set(v)

    bias = putb(bias, B_RI, p["b_ri"])
    bias = putb(bias, B_FC, p["b_fc"])
    bias = putb(bias, B_IH, p["b_ih"])
    bias = putb(bias, B_HH, p["b_hh"])
    bias = putb(bias, B_1F, jnp.concatenate([p["bp1"].reshape(-1), p["bq1"].reshape(-1)]))
    bias = putb(bias, B_2F, jnp.concatenate([p["bp2"].reshape(-1), p["bq2"].reshape(-1)]))
    return mat.astype(jnp.bfloat16), bias


# ----- wrapper ---------------------------------------------------------------
@jax.jit
def rssm_rollout(wmat, wbias, obs_embed_seq, actions_seq, init_stoch, init_deter, gumbel):
    """T-step representation rollout (posterior sample + deter carried across steps).

    obs_embed_seq [T,B,N,E], actions_seq [T,B,N,A], init_* [B,N,*], gumbel [T,B,N,2S].
    T=1 reproduces RSSMRepresentation.forward exactly.
    """
    T, B, N = obs_embed_seq.shape[:3]
    R = B * N
    rpad = max(8, ((R + 7) // 8) * 8)          # pad rows to a full sublane group
    S, D = STOCHASTIC, DETERMINISTIC

    # per-timestep lane-dense input slab: [actions | embed | gumbel | pad] = 128 lanes
    inp = jnp.zeros((T, rpad, IN_LANES), jnp.float32)
    inp = inp.at[:, 0:R, L_ACT:L_ACT + ACTION_SIZE].set(
        actions_seq.reshape(T, R, ACTION_SIZE).astype(jnp.float32))
    inp = inp.at[:, 0:R, L_EMB:L_EMB + EMBED].set(
        obs_embed_seq.reshape(T, R, EMBED).astype(jnp.float32))
    inp = inp.at[:, 0:R, L_GUM:L_GUM + 2 * S].set(gumbel.reshape(T, R, 2 * S))

    init = jnp.zeros((rpad, S + D), jnp.float32)
    init = init.at[0:R, 0:S].set(init_stoch.reshape(R, S).astype(jnp.float32))
    init = init.at[0:R, S:S + D].set(init_deter.reshape(R, D).astype(jnp.float32))

    grid_spec = pltpu.PrefetchScalarGridSpec(
        num_scalar_prefetch=0,
        grid=(T,),
        in_specs=[
            pl.BlockSpec((None, rpad, IN_LANES), lambda t: (t, 0, 0)),   # streamed
            pl.BlockSpec((rpad, S + D), lambda t: (0, 0)),               # resident
            pl.BlockSpec((MAT_ROWS, 128), lambda t: (0, 0)),             # resident
            pl.BlockSpec((8, 128), lambda t: (0, 0)),                    # resident
        ],
        out_specs=pl.BlockSpec((None, rpad, OUT_LANES), lambda t: (t, 0, 0)),
        scratch_shapes=[pltpu.VMEM((rpad, S + D), jnp.float32)],         # carried state
    )
    # TODO(synk): for v7x, add a leading "parallel" grid axis over independent
    # sequences/envs (time stays "arbitrary") so both TensorCores are used.
    out = pl.pallas_call(
        _rssm_rollout_kernel,
        out_shape=jax.ShapeDtypeStruct((T, rpad, OUT_LANES), jnp.float32),
        grid_spec=grid_spec,
        compiler_params=pltpu.CompilerParams(dimension_semantics=("arbitrary",)),
    )(inp, init, wmat, wbias)

    v = out[:, 0:R, :].reshape(T, B, N, OUT_LANES)
    deter = v[..., 2 * S:2 * S + D]
    prior = dict(logits=v[..., 0:S], stoch=v[..., 2 * S + D:3 * S + D], deter=deter)
    posterior = dict(logits=v[..., S:2 * S], stoch=v[..., 3 * S + D:4 * S + D], deter=deter)
    return prior, posterior


def rssm_representation_forward(wmat, wbias, obs_embed, prev_actions,
                                prev_stoch, prev_deter, key):
    """Single-step RSSMRepresentation.forward (T=1 specialization of the rollout)."""
    B, N = obs_embed.shape[:2]
    gumbel = jax.random.gumbel(key, (1, B, N, 2 * STOCHASTIC), jnp.float32)
    prior, posterior = rssm_rollout(wmat, wbias, obs_embed[None], prev_actions[None],
                                    prev_stoch, prev_deter, gumbel)
    sq = lambda d: {k: val[0] for k, val in d.items()}
    return sq(prior), sq(posterior)


# ----- pure-JAX reference single step (same bf16 matmul casting) -------------
def _reference_step(p, actions, embed, stoch_prev, deter_prev):
    def mm(a, w):
        return jnp.dot(a.astype(jnp.bfloat16), w.astype(jnp.bfloat16),
                       preferred_element_type=jnp.float32)

    D = DETERMINISTIC
    x = jnp.maximum(mm(jnp.concatenate([actions, stoch_prev], -1), p["w_ri"]) + p["b_ri"], 0.0)
    attn = jnp.maximum(mm(x, p["w_fc"]) + p["b_fc"], 0.0)
    gi = mm(attn, p["w_ih"]) + p["b_ih"]
    gh = mm(deter_prev, p["w_hh"]) + p["b_hh"]
    r = jax.nn.sigmoid(gi[:, :D] + gh[:, :D])
    z = jax.nn.sigmoid(gi[:, D:2 * D] + gh[:, D:2 * D])
    n = jnp.tanh(gi[:, 2 * D:] + r * gh[:, 2 * D:])
    h = (1.0 - z) * n + z * deter_prev
    hp = jnp.maximum(mm(h, p["wp1"]) + p["bp1"], 0.0)
    hq = jnp.maximum(mm(jnp.concatenate([h, embed], -1), p["wq1"]) + p["bq1"], 0.0)
    prior_logits = mm(hp, p["wp2"]) + p["bp2"]
    post_logits = mm(hq, p["wq2"]) + p["bq2"]
    return prior_logits, post_logits, h


if __name__ == "__main__":
    key = jax.random.PRNGKey(0)
    kp, ko, ka, ks, kd, kg, kg1 = jax.random.split(key, 7)
    params = init_params(kp)
    wmat, wbias = pack_params(params)        # packed once, resident across all steps

    T = 8
    obs_embed_seq = jax.random.normal(ko, (T, BATCH, N_AGENTS, EMBED), jnp.float32)
    actions_seq = jax.random.normal(ka, (T, BATCH, N_AGENTS, ACTION_SIZE), jnp.float32)
    init_stoch = jax.random.normal(ks, (BATCH, N_AGENTS, STOCHASTIC), jnp.float32)
    init_deter = jax.random.normal(kd, (BATCH, N_AGENTS, DETERMINISTIC), jnp.float32)
    gumbel = jax.random.gumbel(kg, (T, BATCH, N_AGENTS, 2 * STOCHASTIC), jnp.float32)

    prior, posterior = rssm_rollout(wmat, wbias, obs_embed_seq, actions_seq,
                                    init_stoch, init_deter, gumbel)
    prior, posterior = jax.block_until_ready((prior, posterior))

    # single-step path (matches the module's forward signature)
    p1, q1 = rssm_representation_forward(wmat, wbias, obs_embed_seq[0], actions_seq[0],
                                         init_stoch, init_deter, kg1)
    jax.block_until_ready((p1, q1))
    assert p1["logits"].shape == (BATCH, N_AGENTS, STOCHASTIC)
    assert q1["stoch"].shape == (BATCH, N_AGENTS, STOCHASTIC)

    R, S, D = ROWS, STOCHASTIC, DETERMINISTIC

    # structural checks: sampled latents are exactly one-hot per categorical
    for st in (prior["stoch"], posterior["stoch"]):
        g = st.reshape(T, BATCH, N_AGENTS, N_CATEGORICALS, N_CLASSES)
        assert jnp.allclose(g.sum(-1), 1.0, atol=1e-5)
        assert bool(jnp.all((g == 0.0) | (g == 1.0)))

    # sampling consistency: one-hot winner == argmax(logits + gumbel) per group
    logits_all = jnp.concatenate([prior["logits"], posterior["logits"]], -1)
    onehot_all = jnp.concatenate([prior["stoch"], posterior["stoch"]], -1)
    yg = (logits_all + gumbel).reshape(T, R, 2 * N_CATEGORICALS, N_CLASSES)
    og = onehot_all.reshape(T, R, 2 * N_CATEGORICALS, N_CLASSES)
    assert bool(jnp.all(jnp.argmax(og, -1) == jnp.argmax(yg, -1)))

    # step-wise numerical check against pure-JAX reference (carries teacher-forced
    # with the kernel's own sampled state so the check is tie-break independent)
    stoch_c = init_stoch.reshape(R, S)
    deter_c = init_deter.reshape(R, D)
    for t in range(T):
        ref_pl, ref_ql, ref_h = _reference_step(
            params, actions_seq[t].reshape(R, -1), obs_embed_seq[t].reshape(R, -1),
            stoch_c, deter_c)
        assert jnp.allclose(prior["logits"][t].reshape(R, -1), ref_pl, atol=5e-3)
        assert jnp.allclose(posterior["logits"][t].reshape(R, -1), ref_ql, atol=5e-3)
        assert jnp.allclose(prior["deter"][t].reshape(R, -1), ref_h, atol=5e-3)
        stoch_c = posterior["stoch"][t].reshape(R, S)
        deter_c = prior["deter"][t].reshape(R, D)

    print("KERNEL_OK")
</pallas_src>

<mosaic_0001>
module attributes {stable_mosaic.version = 11 : i64} {
  func.func @_rssm_rollout_kernel(%arg0: i32, %arg1: memref<1x8x128xf32, #tpu.memory_space<vmem>>, %arg2: memref<8x64xf32, #tpu.memory_space<vmem>>, %arg3: memref<272x128xbf16, #tpu.memory_space<vmem>>, %arg4: memref<8x128xf32, #tpu.memory_space<vmem>>, %arg5: memref<1x8x256xf32, #tpu.memory_space<vmem>>, %arg6: memref<8x64xf32, #tpu.memory_space<vmem>>) attributes {dimension_semantics = [#tpu.dimension_semantics<arbitrary>], iteration_bounds = array<i64: 8>, scalar_prefetch = 0 : i64, scratch_operands = 1 : i64, tpu.core_type = #tpu.core_type<tc>, window_params = [{transform_indices = @transform_0, window_bounds = array<i64: 1, 8, 128>}, {pipeline_mode = #tpu.pipeline_mode<synchronous>, transform_indices = @transform_1, window_bounds = array<i64: 8, 64>}, {pipeline_mode = #tpu.pipeline_mode<synchronous>, transform_indices = @transform_2, window_bounds = array<i64: 272, 128>}, {pipeline_mode = #tpu.pipeline_mode<synchronous>, transform_indices = @transform_3, window_bounds = array<i64: 8, 128>}, {transform_indices = @transform_4, window_bounds = array<i64: 1, 8, 256>}]} {
    %c0_i32 = arith.constant 0 : i32
    %0 = arith.cmpi eq, %arg0, %c0_i32 : i32
    %1 = arith.extui %0 : i1 to i32
    %c0_i32_0 = arith.constant 0 : i32
    %2 = arith.cmpi ne, %1, %c0_i32_0 : i32
    scf.if %2 {
      %c0_77 = arith.constant 0 : index
      %c0_78 = arith.constant 0 : index
      %260 = vector.load %arg2[%c0_77, %c0_78] : memref<8x64xf32, #tpu.memory_space<vmem>>, vector<8x64xf32>
      %c0_79 = arith.constant 0 : index
      %c0_80 = arith.constant 0 : index
      %261 = vector.load %arg6[%c0_79, %c0_80] : memref<8x64xf32, #tpu.memory_space<vmem>>, vector<8x64xf32>
      tpu.vector_store %arg6[%c0_79, %c0_80], %260 {strides = array<i32>} : memref<8x64xf32, #tpu.memory_space<vmem>>, vector<8x64xf32>,
    } else {
    }
    %c0 = arith.constant 0 : index
    %c0_1 = arith.constant 0 : index
    %c0_2 = arith.constant 0 : index
    %3 = vector.load %arg1[%c0, %c0_1, %c0_2] : memref<1x8x128xf32, #tpu.memory_space<vmem>>, vector<1x8x128xf32>
    %4 = vector.shape_cast %3 : vector<1x8x128xf32> to vector<8x128xf32>
    %5 = vector.extract_strided_slice %4 {offsets = [0, 0], sizes = [8, 8], strides = [1, 1]} : vector<8x128xf32> to vector<8x8xf32>
    %6 = vector.extract_strided_slice %4 {offsets = [0, 8], sizes = [8, 24], strides = [1, 1]} : vector<8x128xf32> to vector<8x24xf32>
    %7 = vector.extract_strided_slice %4 {offsets = [0, 32], sizes = [8, 64], strides = [1, 1]} : vector<8x128xf32> to vector<8x64xf32>
    %c0_3 = arith.constant 0 : index
    %c0_4 = arith.constant 0 : index
    %8 = vector.load %arg6[%c0_3, %c0_4] : memref<8x64xf32, #tpu.memory_space<vmem>>, vector<8x64xf32>
    %9 = vector.extract_strided_slice %8 {offsets = [0, 0], sizes = [8, 32], strides = [1, 1]} : vector<8x64xf32> to vector<8x32xf32>
    %10 = vector.extract_strided_slice %8 {offsets = [0, 32], sizes = [8, 32], strides = [1, 1]} : vector<8x64xf32> to vector<8x32xf32>
    %11 = tpu.concatenate %5, %9 in 1 : vector<8x8xf32>, vector<8x32xf32> -> vector<8x40xf32>
    %c0_5 = arith.constant 0 : index
    %c0_6 = arith.constant 0 : index
    %12 = vector.load %arg3[%c0_5, %c0_6] : memref<272x128xbf16, #tpu.memory_space<vmem>>, vector<40x32xbf16>
    %13 = arith.truncf %11 : vector<8x40xf32> to vector<8x40xbf16>
    %cst = arith.constant dense<0.000000e+00> : vector<8x32xf32>
    %14 = tpu.matmul %13, %12, %cst {dimension_numbers = #tpu.dot_dimension_numbers<[1], [0], [0], [1], [0, 0, 1, 1], [], []>} : vector<8x40xbf16>, vector<40x32xbf16>, vector<8x32xf32> -> vector<8x32xf32>
    %c0_7 = arith.constant 0 : index
    %c0_8 = arith.constant 0 : index
    %15 = vector.load %arg4[%c0_7, %c0_8] : memref<8x128xf32, #tpu.memory_space<vmem>>, vector<1x32xf32>
    %16 = vector.broadcast %15 : vector<1x32xf32> to vector<8x32xf32>
    %17 = arith.addf %14, %16 : vector<8x32xf32>
    %cst_9 = arith.constant 0.000000e+00 : f32
    %18 = vector.broadcast %cst_9 : f32 to vector<8x32xf32>
    %19 = arith.maximumf %17, %18 : vector<8x32xf32>
    %c48 = arith.constant 48 : index
    %c0_10 = arith.constant 0 : index
    %20 = vector.load %arg3[%c48, %c0_10] : memref<272x128xbf16, #tpu.memory_space<vmem>>, vector<32x32xbf16>
    %21 = arith.truncf %19 : vector<8x32xf32> to vector<8x32xbf16>
    %cst_11 = arith.constant dense<0.000000e+00> : vector<8x32xf32>
    %22 = tpu.matmul %21, %20, %cst_11 {dimension_numbers = #tpu.dot_dimension_numbers<[1], [0], [0], [1], [0, 0, 1, 1], [], []>} : vector<8x32xbf16>, vector<32x32xbf16>, vector<8x32xf32> -> vector<8x32xf32>
    %c1 = arith.constant 1 : index
    %c0_12 = arith.constant 0 : index
    %23 = vector.load %arg4[%c1, %c0_12] : memref<8x128xf32, #tpu.memory_space<vmem>>, vector<1x32xf32>
    %24 = vector.broadcast %23 : vector<1x32xf32> to vector<8x32xf32>
    %25 = arith.addf %22, %24 : vector<8x32xf32>
    %cst_13 = arith.constant 0.000000e+00 : f32
    %26 = vector.broadcast %cst_13 : f32 to vector<8x32xf32>
    %27 = arith.maximumf %25, %26 : vector<8x32xf32>
    %c80 = arith.constant 80 : index
    %c0_14 = arith.constant 0 : index
    %28 = vector.load %arg3[%c80, %c0_14] : memref<272x128xbf16, #tpu.memory_space<vmem>>, vector<32x96xbf16>
    %29 = arith.truncf %27 : vector<8x32xf32> to vector<8x32xbf16>
    %cst_15 = arith.constant dense<0.000000e+00> : vector<8x96xf32>
    %30 = tpu.matmul %29, %28, %cst_15 {dimension_numbers = #tpu.dot_dimension_numbers<[1], [0], [0], [1], [0, 0, 1, 1], [], []>} : vector<8x32xbf16>, vector<32x96xbf16>, vector<8x96xf32> -> vector<8x96xf32>
    %c2 = arith.constant 2 : index
    %c0_16 = arith.constant 0 : index
    %31 = vector.load %arg4[%c2, %c0_16] : memref<8x128xf32, #tpu.memory_space<vmem>>, vector<1x96xf32>
    %32 = vector.broadcast %31 : vector<1x96xf32> to vector<8x96xf32>
    %33 = arith.addf %30, %32 : vector<8x96xf32>
    %c112 = arith.constant 112 : index
    %c0_17 = arith.constant 0 : index
    %34 = vector.load %arg3[%c112, %c0_17] : memref<272x128xbf16, #tpu.memory_space<vmem>>, vector<32x96xbf16>
    %35 = arith.truncf %10 : vector<8x32xf32> to vector<8x32xbf16>
    %cst_18 = arith.constant dense<0.000000e+00> : vector<8x96xf32>
    %36 = tpu.matmul %35, %34, %cst_18 {dimension_numbers = #tpu.dot_dimension_numbers<[1], [0], [0], [1], [0, 0, 1, 1], [], []>} : vector<8x32xbf16>, vector<32x96xbf16>, vector<8x96xf32> -> vector<8x96xf32>
    %c3 = arith.constant 3 : index
    %c0_19 = arith.constant 0 : index
    %37 = vector.load %arg4[%c3, %c0_19] : memref<8x128xf32, #tpu.memory_space<vmem>>, vector<1x96xf32>
    %38 = vector.broadcast %37 : vector<1x96xf32> to vector<8x96xf32>
    %39 = arith.addf %36, %38 : vector<8x96xf32>
    %40 = vector.extract_strided_slice %33 {offsets = [0, 0], sizes = [8, 32], strides = [1, 1]} : vector<8x96xf32> to vector<8x32xf32>
    %41 = vector.extract_strided_slice %39 {offsets = [0, 0], sizes = [8, 32], strides = [1, 1]} : vector<8x96xf32> to vector<8x32xf32>
    %42 = arith.addf %40, %41 : vector<8x32xf32>
    %43 = arith.negf %42 : vector<8x32xf32>
    %44 = math.exp %43 : vector<8x32xf32>
    %cst_20 = arith.constant 1.000000e+00 : f32
    %45 = vector.broadcast %cst_20 : f32 to vector<8x32xf32>
    %46 = arith.addf %45, %44 : vector<8x32xf32>
    %47 = arith.divf %45, %46 : vector<8x32xf32>
    %48 = vector.extract_strided_slice %33 {offsets = [0, 32], sizes = [8, 32], strides = [1, 1]} : vector<8x96xf32> to vector<8x32xf32>
    %49 = vector.extract_strided_slice %39 {offsets = [0, 32], sizes = [8, 32], strides = [1, 1]} : vector<8x96xf32> to vector<8x32xf32>
    %50 = arith.addf %48, %49 : vector<8x32xf32>
    %51 = arith.negf %50 : vector<8x32xf32>
    %52 = math.exp %51 : vector<8x32xf32>
    %cst_21 = arith.constant 1.000000e+00 : f32
    %53 = vector.broadcast %cst_21 : f32 to vector<8x32xf32>
    %54 = arith.addf %53, %52 : vector<8x32xf32>
    %55 = arith.divf %53, %54 : vector<8x32xf32>
    %56 = vector.extract_strided_slice %33 {offsets = [0, 64], sizes = [8, 32], strides = [1, 1]} : vector<8x96xf32> to vector<8x32xf32>
    %57 = vector.extract_strided_slice %39 {offsets = [0, 64], sizes = [8, 32], strides = [1, 1]} : vector<8x96xf32> to vector<8x32xf32>
    %58 = arith.mulf %47, %57 : vector<8x32xf32>
    %59 = arith.addf %56, %58 : vector<8x32xf32>
    %60 = math.tanh %59 : vector<8x32xf32>
    %cst_22 = arith.constant 1.000000e+00 : f32
    %61 = vector.broadcast %cst_22 : f32 to vector<8x32xf32>
    %62 = arith.subf %61, %55 : vector<8x32xf32>
    %63 = arith.mulf %62, %60 : vector<8x32xf32>
    %64 = arith.mulf %55, %10 : vector<8x32xf32>
    %65 = arith.addf %63, %64 : vector<8x32xf32>
    %66 = tpu.concatenate %65, %6 in 1 : vector<8x32xf32>, vector<8x24xf32> -> vector<8x56xf32>
    %c144 = arith.constant 144 : index
    %c0_23 = arith.constant 0 : index
    %67 = vector.load %arg3[%c144, %c0_23] : memref<272x128xbf16, #tpu.memory_space<vmem>>, vector<56x64xbf16>
    %68 = arith.truncf %66 : vector<8x56xf32> to vector<8x56xbf16>
    %cst_24 = arith.constant dense<0.000000e+00> : vector<8x64xf32>
    %69 = tpu.matmul %68, %67, %cst_24 {dimension_numbers = #tpu.dot_dimension_numbers<[1], [0], [0], [1], [0, 0, 1, 1], [], []>} : vector<8x56xbf16>, vector<56x64xbf16>, vector<8x64xf32> -> vector<8x64xf32>
    %c4 = arith.constant 4 : index
    %c0_25 = arith.constant 0 : index
    %70 = vector.load %arg4[%c4, %c0_25] : memref<8x128xf32, #tpu.memory_space<vmem>>, vector<1x64xf32>
    %71 = vector.broadcast %70 : vector<1x64xf32> to vector<8x64xf32>
    %72 = arith.addf %69, %71 : vector<8x64xf32>
    %cst_26 = arith.constant 0.000000e+00 : f32
    %73 = vector.broadcast %cst_26 : f32 to vector<8x64xf32>
    %74 = arith.maximumf %72, %73 : vector<8x64xf32>
    %c208 = arith.constant 208 : index
    %c0_27 = arith.constant 0 : index
    %75 = vector.load %arg3[%c208, %c0_27] : memref<272x128xbf16, #tpu.memory_space<vmem>>, vector<64x64xbf16>
    %76 = arith.truncf %74 : vector<8x64xf32> to vector<8x64xbf16>
    %cst_28 = arith.constant dense<0.000000e+00> : vector<8x64xf32>
    %77 = tpu.matmul %76, %75, %cst_28 {dimension_numbers = #tpu.dot_dimension_numbers<[1], [0], [0], [1], [0, 0, 1, 1], [], []>} : vector<8x64xbf16>, vector<64x64xbf16>, vector<8x64xf32> -> vector<8x64xf32>
    %c5 = arith.constant 5 : index
    %c0_29 = arith.constant 0 : index
    %78 = vector.load %arg4[%c5, %c0_29] : memref<8x128xf32, #tpu.memory_space<vmem>>, vector<1x64xf32>
    %79 = vector.broadcast %78 : vector<1x64xf32> to vector<8x64xf32>
    %80 = arith.addf %77, %79 : vector<8x64xf32>
    %81 = arith.addf %80, %7 : vector<8x64xf32>
    %82 = tpu.iota {dimensions = array<i32: 1>} : vector<8x64xi32>
    %cst_30 = arith.constant 0.000000e+00 : f32
    %83 = vector.broadcast %cst_30 : f32 to vector<8x64xf32>
    %c0_i32_31 = arith.constant 0 : i32
    %84 = vector.broadcast %c0_i32_31 : i32 to vector<8x64xi32>
    %85 = arith.cmpi sge, %82, %84 : vector<8x64xi32>
    %c8_i32 = arith.constant 8 : i32
    %86 = vector.broadcast %c8_i32 : i32 to vector<8x64xi32>
    %87 = arith.cmpi slt, %82, %86 : vector<8x64xi32>
    %88 = arith.andi %85, %87 : vector<8x64xi1>
    %cst_32 = arith.constant -1.000000e+30 : f32
    %89 = vector.broadcast %cst_32 : f32 to vector<8x64xf32>
    %90 = arith.select %88, %81, %89 : vector<8x64xi1>, vector<8x64xf32>
    %cst_33 = arith.constant dense<0xFF800000> : vector<8xf32>
    %91 = vector.multi_reduction <maximumf>, %90, %cst_33 [1] : vector<8x64xf32> to vector<8xf32>
    %92 = vector.shape_cast %91 : vector<8xf32> to vector<8x1xf32>
    %93 = vector.broadcast %92 : vector<8x1xf32> to vector<8x64xf32>
    %94 = arith.cmpf oge, %90, %93 : vector<8x64xf32>
    %95 = arith.andi %94, %88 : vector<8x64xi1>
    %c64_i32 = arith.constant 64 : i32
    %96 = vector.broadcast %c64_i32 : i32 to vector<8x64xi32>
    %97 = arith.select %95, %82, %96 : vector<8x64xi1>, vector<8x64xi32>
    %cst_34 = arith.constant dense<2147483647> : vector<8xi32>
    %98 = vector.multi_reduction <minsi>, %97, %cst_34 [1] : vector<8x64xi32> to vector<8xi32>
    %99 = vector.shape_cast %98 : vector<8xi32> to vector<8x1xi32>
    %100 = vector.broadcast %99 : vector<8x1xi32> to vector<8x64xi32>
    %101 = arith.cmpi eq, %82, %100 : vector<8x64xi32>
    %102 = arith.extui %101 : vector<8x64xi1> to vector<8x64xi32>
    %103 = arith.sitofp %102 : vector<8x64xi32> to vector<8x64xf32>
    %104 = arith.addf %83, %103 : vector<8x64xf32>
    %c8_i32_35 = arith.constant 8 : i32
    %105 = vector.broadcast %c8_i32_35 : i32 to vector<8x64xi32>
    %106 = arith.cmpi sge, %82, %105 : vector<8x64xi32>
    %c16_i32 = arith.constant 16 : i32
    %107 = vector.broadcast %c16_i32 : i32 to vector<8x64xi32>
    %108 = arith.cmpi slt, %82, %107 : vector<8x64xi32>
    %109 = arith.andi %106, %108 : vector<8x64xi1>
    %cst_36 = arith.constant -1.000000e+30 : f32
    %110 = vector.broadcast %cst_36 : f32 to vector<8x64xf32>
    %111 = arith.select %109, %81, %110 : vector<8x64xi1>, vector<8x64xf32>
    %cst_37 = arith.constant dense<0xFF800000> : vector<8xf32>
    %112 = vector.multi_reduction <maximumf>, %111, %cst_37 [1] : vector<8x64xf32> to vector<8xf32>
    %113 = vector.shape_cast %112 : vector<8xf32> to vector<8x1xf32>
    %114 = vector.broadcast %113 : vector<8x1xf32> to vector<8x64xf32>
    %115 = arith.cmpf oge, %111, %114 : vector<8x64xf32>
    %116 = arith.andi %115, %109 : vector<8x64xi1>
    %c64_i32_38 = arith.constant 64 : i32
    %117 = vector.broadcast %c64_i32_38 : i32 to vector<8x64xi32>
    %118 = arith.select %116, %82, %117 : vector<8x64xi1>, vector<8x64xi32>
    %cst_39 = arith.constant dense<2147483647> : vector<8xi32>
    %119 = vector.multi_reduction <minsi>, %118, %cst_39 [1] : vector<8x64xi32> to vector<8xi32>
    %120 = vector.shape_cast %119 : vector<8xi32> to vector<8x1xi32>
    %121 = vector.broadcast %120 : vector<8x1xi32> to vector<8x64xi32>
    %122 = arith.cmpi eq, %82, %121 : vector<8x64xi32>
    %123 = arith.extui %122 : vector<8x64xi1> to vector<8x64xi32>
    %124 = arith.sitofp %123 : vector<8x64xi32> to vector<8x64xf32>
    %125 = arith.addf %104, %124 : vector<8x64xf32>
    %c16_i32_40 = arith.constant 16 : i32
    %126 = vector.broadcast %c16_i32_40 : i32 to vector<8x64xi32>
    %127 = arith.cmpi sge, %82, %126 : vector<8x64xi32>
    %c24_i32 = arith.constant 24 : i32
    %128 = vector.broadcast %c24_i32 : i32 to vector<8x64xi32>
    %129 = arith.cmpi slt, %82, %128 : vector<8x64xi32>
    %130 = arith.andi %127, %129 : vector<8x64xi1>
    %cst_41 = arith.constant -1.000000e+30 : f32
    %131 = vector.broadcast %cst_41 : f32 to vector<8x64xf32>
    %132 = arith.select %130, %81, %131 : vector<8x64xi1>, vector<8x64xf32>
    %cst_42 = arith.constant dense<0xFF800000> : vector<8xf32>
    %133 = vector.multi_reduction <maximumf>, %132, %cst_42 [1] : vector<8x64xf32> to vector<8xf32>
    %134 = vector.shape_cast %133 : vector<8xf32> to vector<8x1xf32>
    %135 = vector.broadcast %134 : vector<8x1xf32> to vector<8x64xf32>
    %136 = arith.cmpf oge, %132, %135 : vector<8x64xf32>
    %137 = arith.andi %136, %130 : vector<8x64xi1>
    %c64_i32_43 = arith.constant 64 : i32
    %138 = vector.broadcast %c64_i32_43 : i32 to vector<8x64xi32>
    %139 = arith.select %137, %82, %138 : vector<8x64xi1>, vector<8x64xi32>
    %cst_44 = arith.constant dense<2147483647> : vector<8xi32>
    %140 = vector.multi_reduction <minsi>, %139, %cst_44 [1] : vector<8x64xi32> to vector<8xi32>
    %141 = vector.shape_cast %140 : vector<8xi32> to vector<8x1xi32>
    %142 = vector.broadcast %141 : vector<8x1xi32> to vector<8x64xi32>
    %143 = arith.cmpi eq, %82, %142 : vector<8x64xi32>
    %144 = arith.extui %143 : vector<8x64xi1> to vector<8x64xi32>
    %145 = arith.sitofp %144 : vector<8x64xi32> to vector<8x64xf32>
    %146 = arith.addf %125, %145 : vector<8x64xf32>
    %c24_i32_45 = arith.constant 24 : i32
    %147 = vector.broadcast %c24_i32_45 : i32 to vector<8x64xi32>
    %148 = arith.cmpi sge, %82, %147 : vector<8x64xi32>
    %c32_i32 = arith.constant 32 : i32
    %149 = vector.broadcast %c32_i32 : i32 to vector<8x64xi32>
    %150 = arith.cmpi slt, %82, %149 : vector<8x64xi32>
    %151 = arith.andi %148, %150 : vector<8x64xi1>
    %cst_46 = arith.constant -1.000000e+30 : f32
    %152 = vector.broadcast %cst_46 : f32 to vector<8x64xf32>
    %153 = arith.select %151, %81, %152 : vector<8x64xi1>, vector<8x64xf32>
    %cst_47 = arith.constant dense<0xFF800000> : vector<8xf32>
    %154 = vector.multi_reduction <maximumf>, %153, %cst_47 [1] : vector<8x64xf32> to vector<8xf32>
    %155 = vector.shape_cast %154 : vector<8xf32> to vector<8x1xf32>
    %156 = vector.broadcast %155 : vector<8x1xf32> to vector<8x64xf32>
    %157 = arith.cmpf oge, %153, %156 : vector<8x64xf32>
    %158 = arith.andi %157, %151 : vector<8x64xi1>
    %c64_i32_48 = arith.constant 64 : i32
    %159 = vector.broadcast %c64_i32_48 : i32 to vector<8x64xi32>
    %160 = arith.select %158, %82, %159 : vector<8x64xi1>, vector<8x64xi32>
    %cst_49 = arith.constant dense<2147483647> : vector<8xi32>
    %161 = vector.multi_reduction <minsi>, %160, %cst_49 [1] : vector<8x64xi32> to vector<8xi32>
    %162 = vector.shape_cast %161 : vector<8xi32> to vector<8x1xi32>
    %163 = vector.broadcast %162 : vector<8x1xi32> to vector<8x64xi32>
    %164 = arith.cmpi eq, %82, %163 : vector<8x64xi32>
    %165 = arith.extui %164 : vector<8x64xi1> to vector<8x64xi32>
    %166 = arith.sitofp %165 : vector<8x64xi32> to vector<8x64xf32>
    %167 = arith.addf %146, %166 : vector<8x64xf32>
    %c32_i32_50 = arith.constant 32 : i32
    %168 = vector.broadcast %c32_i32_50 : i32 to vector<8x64xi32>
    %169 = arith.cmpi sge, %82, %168 : vector<8x64xi32>
    %c40_i32 = arith.constant 40 : i32
    %170 = vector.broadcast %c40_i32 : i32 to vector<8x64xi32>
    %171 = arith.cmpi slt, %82, %170 : vector<8x64xi32>
    %172 = arith.andi %169, %171 : vector<8x64xi1>
    %cst_51 = arith.constant -1.000000e+30 : f32
    %173 = vector.broadcast %cst_51 : f32 to vector<8x64xf32>
    %174 = arith.select %172, %81, %173 : vector<8x64xi1>, vector<8x64xf32>
    %cst_52 = arith.constant dense<0xFF800000> : vector<8xf32>
    %175 = vector.multi_reduction <maximumf>, %174, %cst_52 [1] : vector<8x64xf32> to vector<8xf32>
    %176 = vector.shape_cast %175 : vector<8xf32> to vector<8x1xf32>
    %177 = vector.broadcast %176 : vector<8x1xf32> to vector<8x64xf32>
    %178 = arith.cmpf oge, %174, %177 : vector<8x64xf32>
    %179 = arith.andi %178, %172 : vector<8x64xi1>
    %c64_i32_53 = arith.constant 64 : i32
    %180 = vector.broadcast %c64_i32_53 : i32 to vector<8x64xi32>
    %181 = arith.select %179, %82, %180 : vector<8x64xi1>, vector<8x64xi32>
    %cst_54 = arith.constant dense<2147483647> : vector<8xi32>
    %182 = vector.multi_reduction <minsi>, %181, %cst_54 [1] : vector<8x64xi32> to vector<8xi32>
    %183 = vector.shape_cast %182 : vector<8xi32> to vector<8x1xi32>
    %184 = vector.broadcast %183 : vector<8x1xi32> to vector<8x64xi32>
    %185 = arith.cmpi eq, %82, %184 : vector<8x64xi32>
    %186 = arith.extui %185 : vector<8x64xi1> to vector<8x64xi32>
    %187 = arith.sitofp %186 : vector<8x64xi32> to vector<8x64xf32>
    %188 = arith.addf %167, %187 : vector<8x64xf32>
    %c40_i32_55 = arith.constant 40 : i32
    %189 = vector.broadcast %c40_i32_55 : i32 to vector<8x64xi32>
    %190 = arith.cmpi sge, %82, %189 : vector<8x64xi32>
    %c48_i32 = arith.constant 48 : i32
    %191 = vector.broadcast %c48_i32 : i32 to vector<8x64xi32>
    %192 = arith.cmpi slt, %82, %191 : vector<8x64xi32>
    %193 = arith.andi %190, %192 : vector<8x64xi1>
    %cst_56 = arith.constant -1.000000e+30 : f32
    %194 = vector.broadcast %cst_56 : f32 to vector<8x64xf32>
    %195 = arith.select %193, %81, %194 : vector<8x64xi1>, vector<8x64xf32>
    %cst_57 = arith.constant dense<0xFF800000> : vector<8xf32>
    %196 = vector.multi_reduction <maximumf>, %195, %cst_57 [1] : vector<8x64xf32> to vector<8xf32>
    %197 = vector.shape_cast %196 : vector<8xf32> to vector<8x1xf32>
    %198 = vector.broadcast %197 : vector<8x1xf32> to vector<8x64xf32>
    %199 = arith.cmpf oge, %195, %198 : vector<8x64xf32>
    %200 = arith.andi %199, %193 : vector<8x64xi1>
    %c64_i32_58 = arith.constant 64 : i32
    %201 = vector.broadcast %c64_i32_58 : i32 to vector<8x64xi32>
    %202 = arith.select %200, %82, %201 : vector<8x64xi1>, vector<8x64xi32>
    %cst_59 = arith.constant dense<2147483647> : vector<8xi32>
    %203 = vector.multi_reduction <minsi>, %202, %cst_59 [1] : vector<8x64xi32> to vector<8xi32>
    %204 = vector.shape_cast %203 : vector<8xi32> to vector<8x1xi32>
    %205 = vector.broadcast %204 : vector<8x1xi32> to vector<8x64xi32>
    %206 = arith.cmpi eq, %82, %205 : vector<8x64xi32>
    %207 = arith.extui %206 : vector<8x64xi1> to vector<8x64xi32>
    %208 = arith.sitofp %207 : vector<8x64xi32> to vector<8x64xf32>
    %209 = arith.addf %188, %208 : vector<8x64xf32>
    %c48_i32_60 = arith.constant 48 : i32
    %210 = vector.broadcast %c48_i32_60 : i32 to vector<8x64xi32>
    %211 = arith.cmpi sge, %82, %210 : vector<8x64xi32>
    %c56_i32 = arith.constant 56 : i32
    %212 = vector.broadcast %c56_i32 : i32 to vector<8x64xi32>
    %213 = arith.cmpi slt, %82, %212 : vector<8x64xi32>
    %214 = arith.andi %211, %213 : vector<8x64xi1>
    %cst_61 = arith.constant -1.000000e+30 : f32
    %215 = vector.broadcast %cst_61 : f32 to vector<8x64xf32>
    %216 = arith.select %214, %81, %215 : vector<8x64xi1>, vector<8x64xf32>
    %cst_62 = arith.constant dense<0xFF800000> : vector<8xf32>
    %217 = vector.multi_reduction <maximumf>, %216, %cst_62 [1] : vector<8x64xf32> to vector<8xf32>
    %218 = vector.shape_cast %217 : vector<8xf32> to vector<8x1xf32>
    %219 = vector.broadcast %218 : vector<8x1xf32> to vector<8x64xf32>
    %220 = arith.cmpf oge, %216, %219 : vector<8x64xf32>
    %221 = arith.andi %220, %214 : vector<8x64xi1>
    %c64_i32_63 = arith.constant 64 : i32
    %222 = vector.broadcast %c64_i32_63 : i32 to vector<8x64xi32>
    %223 = arith.select %221, %82, %222 : vector<8x64xi1>, vector<8x64xi32>
    %cst_64 = arith.constant dense<2147483647> : vector<8xi32>
    %224 = vector.multi_reduction <minsi>, %223, %cst_64 [1] : vector<8x64xi32> to vector<8xi32>
    %225 = vector.shape_cast %224 : vector<8xi32> to vector<8x1xi32>
    %226 = vector.broadcast %225 : vector<8x1xi32> to vector<8x64xi32>
    %227 = arith.cmpi eq, %82, %226 : vector<8x64xi32>
    %228 = arith.extui %227 : vector<8x64xi1> to vector<8x64xi32>
    %229 = arith.sitofp %228 : vector<8x64xi32> to vector<8x64xf32>
    %230 = arith.addf %209, %229 : vector<8x64xf32>
    %c56_i32_65 = arith.constant 56 : i32
    %231 = vector.broadcast %c56_i32_65 : i32 to vector<8x64xi32>
    %232 = arith.cmpi sge, %82, %231 : vector<8x64xi32>
    %c64_i32_66 = arith.constant 64 : i32
    %233 = vector.broadcast %c64_i32_66 : i32 to vector<8x64xi32>
    %234 = arith.cmpi slt, %82, %233 : vector<8x64xi32>
    %235 = arith.andi %232, %234 : vector<8x64xi1>
    %cst_67 = arith.constant -1.000000e+30 : f32
    %236 = vector.broadcast %cst_67 : f32 to vector<8x64xf32>
    %237 = arith.select %235, %81, %236 : vector<8x64xi1>, vector<8x64xf32>
    %cst_68 = arith.constant dense<0xFF800000> : vector<8xf32>
    %238 = vector.multi_reduction <maximumf>, %237, %cst_68 [1] : vector<8x64xf32> to vector<8xf32>
    %239 = vector.shape_cast %238 : vector<8xf32> to vector<8x1xf32>
    %240 = vector.broadcast %239 : vector<8x1xf32> to vector<8x64xf32>
    %241 = arith.cmpf oge, %237, %240 : vector<8x64xf32>
    %242 = arith.andi %241, %235 : vector<8x64xi1>
    %c64_i32_69 = arith.constant 64 : i32
    %243 = vector.broadcast %c64_i32_69 : i32 to vector<8x64xi32>
    %244 = arith.select %242, %82, %243 : vector<8x64xi1>, vector<8x64xi32>
    %cst_70 = arith.constant dense<2147483647> : vector<8xi32>
    %245 = vector.multi_reduction <minsi>, %244, %cst_70 [1] : vector<8x64xi32> to vector<8xi32>
    %246 = vector.shape_cast %245 : vector<8xi32> to vector<8x1xi32>
    %247 = vector.broadcast %246 : vector<8x1xi32> to vector<8x64xi32>
    %248 = arith.cmpi eq, %82, %247 : vector<8x64xi32>
    %249 = arith.extui %248 : vector<8x64xi1> to vector<8x64xi32>
    %250 = arith.sitofp %249 : vector<8x64xi32> to vector<8x64xf32>
    %251 = arith.addf %230, %250 : vector<8x64xf32>
    %252 = vector.extract_strided_slice %251 {offsets = [0, 32], sizes = [8, 32], strides = [1, 1]} : vector<8x64xf32> to vector<8x32xf32>
    %253 = tpu.concatenate %252, %65 in 1 : vector<8x32xf32>, vector<8x32xf32> -> vector<8x64xf32>
    %c0_71 = arith.constant 0 : index
    %c0_72 = arith.constant 0 : index
    %254 = vector.load %arg6[%c0_71, %c0_72] : memref<8x64xf32, #tpu.memory_space<vmem>>, vector<8x64xf32>
    tpu.vector_store %arg6[%c0_71, %c0_72], %253 {strides = array<i32>} : memref<8x64xf32, #tpu.memory_space<vmem>>, vector<8x64xf32>,
    %cst_73 = arith.constant 0.000000e+00 : f32
    %255 = vector.broadcast %cst_73 : f32 to vector<8x96xf32>
    %256 = tpu.concatenate %80, %65, %251, %255 in 1 : vector<8x64xf32>, vector<8x32xf32>, vector<8x64xf32>, vector<8x96xf32> -> vector<8x256xf32>
    %c0_74 = arith.constant 0 : index
    %c0_75 = arith.constant 0 : index
    %c0_76 = arith.constant 0 : index
    %257 = vector.load %arg5[%c0_74, %c0_75, %c0_76] : memref<1x8x256xf32, #tpu.memory_space<vmem>>, vector<1x8x256xf32>
    %258 = vector.shape_cast %257 : vector<1x8x256xf32> to vector<8x256xf32>
    %259 = vector.shape_cast %256 : vector<8x256xf32> to vector<1x8x256xf32>
    tpu.vector_store %arg5[%c0_74, %c0_75, %c0_76], %259 {strides = array<i32>} : memref<1x8x256xf32, #tpu.memory_space<vmem>>, vector<1x8x256xf32>,
    return
  }
  func.func @transform_0(%arg0: i32) -> (i32, i32, i32) {
    %c0_i32 = arith.constant 0 : i32
    %c0_i32_0 = arith.constant 0 : i32
    %c0_i32_1 = arith.constant 0 : i32
    return %arg0, %c0_i32, %c0_i32_0 : i32, i32, i32
  }
  func.func @transform_1(%arg0: i32) -> (i32, i32) {
    %c0_i32 = arith.constant 0 : i32
    %c0_i32_0 = arith.constant 0 : i32
    %c0_i32_1 = arith.constant 0 : i32
    return %c0_i32, %c0_i32_0 : i32, i32
  }
  func.func @transform_2(%arg0: i32) -> (i32, i32) {
    %c0_i32 = arith.constant 0 : i32
    %c0_i32_0 = arith.constant 0 : i32
    %c0_i32_1 = arith.constant 0 : i32
    return %c0_i32, %c0_i32_0 : i32, i32
  }
  func.func @transform_3(%arg0: i32) -> (i32, i32) {
    %c0_i32 = arith.constant 0 : i32
    %c0_i32_0 = arith.constant 0 : i32
    %c0_i32_1 = arith.constant 0 : i32
    return %c0_i32, %c0_i32_0 : i32, i32
  }
  func.func @transform_4(%arg0: i32) -> (i32, i32, i32) {
    %c0_i32 = arith.constant 0 : i32
    %c0_i32_0 = arith.constant 0 : i32
    %c0_i32_1 = arith.constant 0 : i32
    return %arg0, %c0_i32, %c0_i32_0 : i32, i32, i32
  }
}

</mosaic_0001>

<llo_original>
// kernel: rssm_rollout.1
$region0: #{rssm_rollout.1}
  #allocation0 [shape = 'u32[]', space=smem, size = 0x4, offset = 0x4, fixed_abs, tag = 'smem constant byte address 0x4 - core index']
  #allocation1 [shape = 'u32[144,128]{1,0:T(1,128)}', space=vmem, size = 0x12000, scoped, tag = 'internal scratch']
  #allocation2 [shape = 'f32[8,64]{1,0:T(8,128)}', space=vmem, size = 0x1000, scoped, tag = 'scratch operand']
  %s0 = inlined_call_operand.vmem [shape: f32[8,8,128], index: 0, kind: input, shape index: {}]
  %s1 = inlined_call_operand.vmem [shape: f32[8,64], index: 1, kind: input, shape index: {}]
  %s2 = inlined_call_operand.vmem [shape: bf16[272,128], index: 2, kind: input, shape index: {}]
  %s3 = inlined_call_operand.vmem [shape: f32[8,128], index: 3, kind: input, shape index: {}]
  %s4 = inlined_call_operand.vmem [shape: f32[8,8,256], index: 4, kind: output, shape index: {}]
  %s5 = sld [smem:[#allocation0]]
  $region53: #{rssm_rollout.1} parent=0
    _
  %s7 = ssub.s32 1, %s5
  %s8 = scalar_select 0, %s7, %s5
  loop: start=0, step=1, limit=10
  $region2: #{rssm_rollout.1} parent=0 // loop_pre_header
    _
  $region3: #{rssm_rollout.1} parent=0 // loop_header
    %s10 = sphi 0, %s14
    %p11 = scmp.ge.s32.totalorder %s10, 10
    %s20 = sphi 0, %s22
    %s23 = sphi 0, %s20
    %s24 = sphi 0, %s23
    %s40 = sphi 0, %s24
    %s44 = sphi 0, %s44
    %s46 = sphi 0, %s44
    %s47 = sphi 0, %s46
    %s61 = sphi 0, %s47
    %s65 = sphi 0, %s65
    %s67 = sphi 0, %s65
    %s68 = sphi 0, %s67
    %s82 = sphi 0, %s68
    %s86 = sphi 0, %s86
    %s88 = sphi 0, %s86
    %s89 = sphi 0, %s88
    %s103 = sphi 0, %s89
    %s109 = sphi 0, %s111
    %s112 = sphi 0, %s109
    %s113 = sphi 0, %s112
    %s129 = sphi 0, %s113
  $region4: #{rssm_rollout.1} parent=0 // loop_header_branch
    %13 = sbr.rel (%p11) target = $region8
  $region5: #{rssm_rollout.1} parent=0 // loop_body
    %s15 = ssub.s32 %s10, 1
    %s16 = ssub.s32 %s10, 2
    %s17 = sadd.s32 %s10, 1
    %s18 = ssub.s32 %s10, %s17
    %p19 = scmp.eq.s32.totalorder %s18, 0
    %s21 = sadd.s32 %s20, 1
    %s22 = scalar_select %p19, %s20, %s21
    %p25 = pneg %p19
    %p26 = scmp.eq.s32.totalorder %s10, 7
    %p27 = por %p25, %p26
    %p28 = scmp.ne.s32.totalorder %s20, %s23
    %p29 = scmp.eq.s32.totalorder %s10, 0
    %p30 = por %p28, %p29
    %p31 = scmp.ne.s32.totalorder %s20, %s23
    %p32 = scmp.eq.s32.totalorder %s15, 7
    %p33 = por %p31, %p32
    %p34 = scmp.ne.s32.totalorder %s23, %s24
    %p35 = scmp.eq.s32.totalorder %s15, 0
    %p36 = por %p34, %p35
    %p37 = scmp.ne.s32.totalorder %s23, %s24
    %p38 = scmp.eq.s32.totalorder %s16, 7
    %p39 = por %p37, %p38
    %p41 = scmp.ne.s32.totalorder %s24, %s40
    %p42 = scmp.eq.s32.totalorder %s16, 0
    %p43 = por %p41, %p42
    %s45 = sadd.s32 %s44, 1
    %p48 = scmp.eq.s32.totalorder %s10, 7
    %p49 = scmp.ne.s32.totalorder %s44, %s46
    %p50 = scmp.eq.s32.totalorder %s10, 0
    %p51 = por %p49, %p50
    %p52 = scmp.ne.s32.totalorder %s44, %s46
    %p53 = scmp.eq.s32.totalorder %s15, 7
    %p54 = por %p52, %p53
    %p55 = scmp.ne.s32.totalorder %s46, %s47
    %p56 = scmp.eq.s32.totalorder %s15, 0
    %p57 = por %p55, %p56
    %p58 = scmp.ne.s32.totalorder %s46, %s47
    %p59 = scmp.eq.s32.totalorder %s16, 7
    %p60 = por %p58, %p59
    %p62 = scmp.ne.s32.totalorder %s47, %s61
    %p63 = scmp.eq.s32.totalorder %s16, 0
    %p64 = por %p62, %p63
    %s66 = sadd.s32 %s65, 1
    %p69 = scmp.eq.s32.totalorder %s10, 7
    %p70 = scmp.ne.s32.totalorder %s65, %s67
    %p71 = scmp.eq.s32.totalorder %s10, 0
    %p72 = por %p70, %p71
    %p73 = scmp.ne.s32.totalorder %s65, %s67
    %p74 = scmp.eq.s32.totalorder %s15, 7
    %p75 = por %p73, %p74
    %p76 = scmp.ne.s32.totalorder %s67, %s68
    %p77 = scmp.eq.s32.totalorder %s15, 0
    %p78 = por %p76, %p77
    %p79 = scmp.ne.s32.totalorder %s67, %s68
    %p80 = scmp.eq.s32.totalorder %s16, 7
    %p81 = por %p79, %p80
    %p83 = scmp.ne.s32.totalorder %s68, %s82
    %p84 = scmp.eq.s32.totalorder %s16, 0
    %p85 = por %p83, %p84
    %s87 = sadd.s32 %s86, 1
    %p90 = scmp.eq.s32.totalorder %s10, 7
    %p91 = scmp.ne.s32.totalorder %s86, %s88
    %p92 = scmp.eq.s32.totalorder %s10, 0
    %p93 = por %p91, %p92
    %p94 = scmp.ne.s32.totalorder %s86, %s88
    %p95 = scmp.eq.s32.totalorder %s15, 7
    %p96 = por %p94, %p95
    %p97 = scmp.ne.s32.totalorder %s88, %s89
    %p98 = scmp.eq.s32.totalorder %s15, 0
    %p99 = por %p97, %p98
    %p100 = scmp.ne.s32.totalorder %s88, %s89
    %p101 = scmp.eq.s32.totalorder %s16, 7
    %p102 = por %p100, %p101
    %p104 = scmp.ne.s32.totalorder %s89, %s103
    %p105 = scmp.eq.s32.totalorder %s16, 0
    %p106 = por %p104, %p105
    %s107 = ssub.s32 %s10, %s17
    %p108 = scmp.eq.s32.totalorder %s107, 0
    %s110 = sadd.s32 %s109, 1
    %s111 = scalar_select %p108, %s109, %s110
    %p114 = pneg %p108
    %p115 = scmp.eq.s32.totalorder %s10, 7
    %p116 = por %p114, %p115
    %p117 = scmp.ne.s32.totalorder %s109, %s112
    %p118 = scmp.eq.s32.totalorder %s10, 0
    %p119 = por %p117, %p118
    %p120 = scmp.ne.s32.totalorder %s109, %s112
    %p121 = scmp.eq.s32.totalorder %s15, 7
    %p122 = por %p120, %p121
    %p123 = scmp.ne.s32.totalorder %s112, %s113
    %p124 = scmp.eq.s32.totalorder %s15, 0
    %p125 = por %p123, %p124
    %p126 = scmp.ne.s32.totalorder %s112, %s113
    %p127 = scmp.eq.s32.totalorder %s16, 7
    %p128 = por %p126, %p127
    %p130 = scmp.ne.s32.totalorder %s113, %s129
    %p131 = scmp.eq.s32.totalorder %s16, 0
    %p132 = por %p130, %p131
    %p133 = scmp.le.s32.totalorder 1, %s10
    %p134 = scmp.lt.s32.totalorder %s10, 9
    %p135 = pnand %p133, %p134
    %p136 = pneg %p135
    // Predicated region
    $region9: #{rssm_rollout.1} parent=5 // pred_check
      _
    $region10: #{rssm_rollout.1} parent=5 // pred_check_branch
      %138 = sbr.rel (%p135) target = $region12
    $region11: #{rssm_rollout.1} parent=5 // pred_region
      %s139 = ssub.s32 %s10, 1
      // Predicated region
      $region13: #{rssm_rollout.1} parent=11 // pred_check
        %p140 = pneg %p57
      $region14: #{rssm_rollout.1} parent=11 // pred_check_branch
        %142 = sbr.rel (%p140) target = $region16
      $region15: #{rssm_rollout.1} parent=11 // pred_region
        _
      $region16: #{rssm_rollout.1} parent=11 // pred_fallthru
        _
      // Predicated region
      $region17: #{rssm_rollout.1} parent=11 // pred_check
        %p143 = pneg %p78
      $region18: #{rssm_rollout.1} parent=11 // pred_check_branch
        %145 = sbr.rel (%p143) target = $region20
      $region19: #{rssm_rollout.1} parent=11 // pred_region
        _
      $region20: #{rssm_rollout.1} parent=11 // pred_fallthru
        _
      // Predicated region
      $region21: #{rssm_rollout.1} parent=11 // pred_check
        %p146 = pneg %p99
      $region22: #{rssm_rollout.1} parent=11 // pred_check_branch
        %148 = sbr.rel (%p146) target = $region24
      $region23: #{rssm_rollout.1} parent=11 // pred_region
        _
      $region24: #{rssm_rollout.1} parent=11 // pred_fallthru
        _
    $region12: #{rssm_rollout.1} parent=5 // pred_fallthru
      _
    %p149 = scmp.lt.s32.totalorder %s10, 8
    // Predicated region
    $region25: #{rssm_rollout.1} parent=5 // pred_check
      %p150 = pneg %p149
    $region26: #{rssm_rollout.1} parent=5 // pred_check_branch
      %152 = sbr.rel (%p150) target = $region28
    $region27: #{rssm_rollout.1} parent=5 // pred_region
      // Predicated region
      $region29: #{rssm_rollout.1} parent=27 // pred_check
        %p153 = pneg %p30
      $region30: #{rssm_rollout.1} parent=27 // pred_check_branch
        %155 = sbr.rel (%p153) target = $region32
      $region31: #{rssm_rollout.1} parent=27 // pred_region
        %p156 = scmp.lt.s32.totalorder %s10, 7
        %s157 = scalar_select %p156, %s10, 7
        %s158 = smul.addr %s157, 8
        %s159 = scalar_lea.vmem %s0, %s158
      $region32: #{rssm_rollout.1} parent=27 // pred_fallthru
        _
    $region28: #{rssm_rollout.1} parent=5 // pred_fallthru
      _
    %p160 = scmp.le.s32.totalorder 1, %s10
    %p161 = scmp.lt.s32.totalorder %s10, 9
    %p162 = pnand %p160, %p161
    %p163 = pneg %p162
    // Predicated region
    $region33: #{rssm_rollout.1} parent=5 // pred_check
      _
    $region34: #{rssm_rollout.1} parent=5 // pred_check_branch
      %165 = sbr.rel (%p162) target = $region36
    $region35: #{rssm_rollout.1} parent=5 // pred_region
      %s166 = ssub.s32 %s10, 1
      %p167 = scmp.lt.s32.totalorder %s15, 7
      %s168 = scalar_select %p167, %s15, 7
      %s169 = smul.addr %s168, 8
      %s170 = scalar_lea.vmem %s0, %s169
      %p171 = pneg %p36
      %p172 = pneg %p33
      %p173 = pneg %p57
      %p174 = pneg %p54
      %p175 = pneg %p78
      %p176 = pneg %p75
      %p177 = pneg %p99
      %p178 = pneg %p96
      %p179 = pneg %p125
      %p180 = pneg %p122
      %p181 = scmp.lt.s32.totalorder %s15, 7
      %s182 = scalar_select %p181, %s15, 7
      %s183 = smul.addr %s182, 2
      %s184 = smul.addr %s183, 8
      %s185 = scalar_lea.vmem %s4, %s184
      %p186 = scmp.lt.s32.totalorder %s15, 7
      %s187 = scalar_select %p186, %s15, 7
      %s188 = smul.addr %s187, 8
      %s189 = scalar_lea.vmem %s0, %s188
      %p190 = scmp.lt.s32.totalorder %s15, 7
      %s191 = scalar_select %p190, %s15, 7
      %s192 = smul.addr %s191, 2
      %s193 = smul.addr %s192, 8
      %s194 = scalar_lea.vmem %s4, %s193
      %p196 = scmp.eq.s32.totalorder %s15, 0
      // Predicated region
      $region37: #{rssm_rollout.1} parent=35 // pred_check
        %p197 = pneg %p196
      $region38: #{rssm_rollout.1} parent=35 // pred_check_branch
        %199 = sbr.rel (%p197) target = $region40
      $region39: #{rssm_rollout.1} parent=35 // pred_region
        %v200 = vld [vmem:[%s1] sm:$0xff]
        %vm201 = vcmask 523264
        %202 = vst.msk [vmem:[#allocation2] sm:$0xff] %vm201, %v200
      $region40: #{rssm_rollout.1} parent=35 // pred_fallthru
        _
      %v203 = vld [vmem:[%s189] sm:$0xff]
      %v204 = vld [vmem:[#allocation2] sm:$0xff]
      %206 = vrot.lane.b32.xlu0 %v204, 8
      %v207 = vpop.permute.xlu0 %206
      %vm209 = vcmask 64512
      %v210 = vsel %vm209, %v203, %v207
      %v211 = vld [vmem:[%s2] sm:$0xf]
      %v212 = vld [vmem:[%s2 + $0x4] sm:$0xf]
      %v213 = vld [vmem:[%s2 + $0x8] sm:$0xf]
      %v214 = vld [vmem:[%s2 + $0xc] sm:$0xf]
      %v215 = vld [vmem:[%s2 + $0x10] sm:$0xf]
      %v216 = vpack.c.bf16 %v210, %v210
      %v217 = vld [vmem:[%s3] sm:$0x1]
      %v218 = vlaneseq
      %v219 = vshrl.u32 %v218, 7
      %v220 = vsub.s32 0, %v219
      %v221 = vrot.slane %v217, %v220
      %v227 = vunpack.c.l.b16 %v211
      %v228 = vunpack.c.l.b16 %v212
      %v229 = vunpack.c.l.b16 %v213
      %v230 = vunpack.c.l.b16 %v214
      %v231 = vunpack.c.l.b16 %v215
      %v232 = vpack.c.b16 %v228, %v227
      %v233 = vpack.c.b16 %v230, %v229
      %v234 = vpack.c.b16 %v231, %v231
      %vm237 = vcmask 326656
      %v239 = vsel %vm237, %v216, 0
      %vm241 = vcmask 1043456
      %v243 = vsel %vm241, %v234, 0
      %245 = vmatprep.subr.bf16.mxu0 0
      %246 = vmatpush1.bf16.msra.mxu0 0
      %247 = vmatprep.subr.bf16.mxu0 0
      %248 = vmatpush1.bf16.msra.mxu0 0
      %249 = vmatprep.subr.bf16.mxu0 0
      %250 = vmatpush1.bf16.msra.mxu0 0
      %251 = vmatprep.subr.bf16.mxu0 0
      %252 = vmatpush1.bf16.msra.mxu0 0
      %253 = vmatprep.subr.bf16.mxu0 0
      %254 = vmatpush1.bf16.msra.mxu0 0
      %255 = vmatprep.subr.bf16.mxu0 0
      %256 = vmatpush1.bf16.msra.mxu0 %v243
      %257 = vmatprep.subr.bf16.mxu0 0
      %258 = vmatpush1.bf16.msra.mxu0 %v233
      %259 = vmatprep.subr.bf16.mxu0 0
      %260 = vmatpush1.bf16.msra.mxu0 %v232
      %261 = vmatprep.subr.bf16.mxu0 0
      %262 = vmatpush2.bf16.msra.mxu0 0
      %263 = vmatprep.subr.bf16.mxu0 0
      %264 = vmatpush2.bf16.msra.mxu0 0
      %265 = vmatprep.subr.bf16.mxu0 0
      %266 = vmatpush2.bf16.msra.mxu0 0
      %267 = vmatprep.subr.bf16.mxu0 0
      %268 = vmatpush2.bf16.msra.mxu0 0
      %269 = vmatprep.subr.bf16.mxu0 0
      %270 = vmatpush2.bf16.msra.mxu0 0
      %271 = vmatprep.subr.bf16.mxu0 0
      %272 = vmatpush2.bf16.msra.mxu0 0
      %273 = vmatprep.subr.bf16.mxu0 0
      %274 = vmatpush2.bf16.msra.mxu0 0
      %275 = vmatprep.subr.bf16.mxu0 0
      %276 = vmatpush2.bf16.msra.mxu0 0
      %277 = vmatprep.mubr.bf16.mxu0 0
      %278 = vmatmul.mubr.bf16.gmra.mxu0 %v239
      %v279 = vpop.f32.mrf.mxu0
      %v280 = vadd.f32 %v221, %v279
      %v281 = vpop.f32.mrf.mxu0
      %v282 = vpop.f32.mrf.mxu0
      %v283 = vpop.f32.mrf.mxu0
      %284 = vdwg.mxu0
      %v285 = vmax.f32 %v280, 0.0
      %v286 = vld [vmem:[%s2 + $0x18] sm:$0xf]
      %v287 = vld [vmem:[%s2 + $0x1c] sm:$0xf]
      %v288 = vld [vmem:[%s2 + $0x20] sm:$0xf]
      %v289 = vld [vmem:[%s2 + $0x24] sm:$0xf]
      %v290 = vpack.c.bf16 %v285, %v285
      %v291 = vld [vmem:[%s3 + $0x1] sm:$0x1]
      %v292 = vlaneseq
      %v293 = vshrl.u32 %v292, 7
      %v294 = vsub.s32 0, %v293
      %v295 = vrot.slane %v291, %v294
      %v300 = vunpack.c.l.b16 %v286
      %v301 = vunpack.c.l.b16 %v287
      %v302 = vunpack.c.l.b16 %v288
      %v303 = vunpack.c.l.b16 %v289
      %v304 = vpack.c.b16 %v301, %v300
      %v305 = vpack.c.b16 %v303, %v302
      %vm308 = vcmask 261120
      %v310 = vsel %vm308, %v290, 0
      %312 = vmatprep.subr.bf16.mxu0 0
      %313 = vmatpush1.bf16.msra.mxu0 0
      %314 = vmatprep.subr.bf16.mxu0 0
      %315 = vmatpush1.bf16.msra.mxu0 0
      %316 = vmatprep.subr.bf16.mxu0 0
      %317 = vmatpush1.bf16.msra.mxu0 0
      %318 = vmatprep.subr.bf16.mxu0 0
      %319 = vmatpush1.bf16.msra.mxu0 0
      %320 = vmatprep.subr.bf16.mxu0 0
      %321 = vmatpush1.bf16.msra.mxu0 0
      %322 = vmatprep.subr.bf16.mxu0 0
      %323 = vmatpush1.bf16.msra.mxu0 0
      %324 = vmatprep.subr.bf16.mxu0 0
      %325 = vmatpush1.bf16.msra.mxu0 %v305
      %326 = vmatprep.subr.bf16.mxu0 0
      %327 = vmatpush1.bf16.msra.mxu0 %v304
      %328 = vmatprep.subr.bf16.mxu0 0
      %329 = vmatpush2.bf16.msra.mxu0 0
      %330 = vmatprep.subr.bf16.mxu0 0
      %331 = vmatpush2.bf16.msra.mxu0 0
      %332 = vmatprep.subr.bf16.mxu0 0
      %333 = vmatpush2.bf16.msra.mxu0 0
      %334 = vmatprep.subr.bf16.mxu0 0
      %335 = vmatpush2.bf16.msra.mxu0 0
      %336 = vmatprep.subr.bf16.mxu0 0
      %337 = vmatpush2.bf16.msra.mxu0 0
      %338 = vmatprep.subr.bf16.mxu0 0
      %339 = vmatpush2.bf16.msra.mxu0 0
      %340 = vmatprep.subr.bf16.mxu0 0
      %341 = vmatpush2.bf16.msra.mxu0 0
      %342 = vmatprep.subr.bf16.mxu0 0
      %343 = vmatpush2.bf16.msra.mxu0 0
      %344 = vmatprep.mubr.bf16.mxu0 0
      %345 = vmatmul.mubr.bf16.gmra.mxu0 %v310
      %v346 = vpop.f32.mrf.mxu0
      %v347 = vadd.f32 %v295, %v346
      %v348 = vpop.f32.mrf.mxu0
      %v349 = vpop.f32.mrf.mxu0
      %v350 = vpop.f32.mrf.mxu0
      %351 = vdwg.mxu0
      %v352 = vmax.f32 %v347, 0.0
      %v353 = vld [vmem:[%s2 + $0x28] sm:$0xf]
      %v354 = vld [vmem:[%s2 + $0x2c] sm:$0xf]
      %v355 = vld [vmem:[%s2 + $0x30] sm:$0xf]
      %v356 = vld [vmem:[%s2 + $0x34] sm:$0xf]
      %v357 = vpack.c.bf16 %v352, %v352
      %v358 = vld [vmem:[%s3 + $0x2] sm:$0x1]
      %v359 = vlaneseq
      %v360 = vshrl.u32 %v359, 7
      %v361 = vsub.s32 0, %v360
      %v362 = vrot.slane %v358, %v361
      %v367 = vunpack.c.l.b16 %v353
      %v368 = vunpack.c.l.b16 %v354
      %v369 = vunpack.c.l.b16 %v355
      %v370 = vunpack.c.l.b16 %v356
      %v371 = vpack.c.b16 %v368, %v367
      %v372 = vpack.c.b16 %v370, %v369
      %v376 = vsel %vm308, %v357, 0
      %378 = vmatprep.subr.bf16.mxu0 0
      %379 = vmatpush1.bf16.msra.mxu0 0
      %380 = vmatprep.subr.bf16.mxu0 0
      %381 = vmatpush1.bf16.msra.mxu0 0
      %382 = vmatprep.subr.bf16.mxu0 0
      %383 = vmatpush1.bf16.msra.mxu0 0
      %384 = vmatprep.subr.bf16.mxu0 0
      %385 = vmatpush1.bf16.msra.mxu0 0
      %386 = vmatprep.subr.bf16.mxu0 0
      %387 = vmatpush1.bf16.msra.mxu0 0
      %388 = vmatprep.subr.bf16.mxu0 0
      %389 = vmatpush1.bf16.msra.mxu0 0
      %390 = vmatprep.subr.bf16.mxu0 0
      %391 = vmatpush1.bf16.msra.mxu0 %v372
      %392 = vmatprep.subr.bf16.mxu0 0
      %393 = vmatpush1.bf16.msra.mxu0 %v371
      %394 = vmatprep.subr.bf16.mxu0 0
      %395 = vmatpush2.bf16.msra.mxu0 0
      %396 = vmatprep.subr.bf16.mxu0 0
      %397 = vmatpush2.bf16.msra.mxu0 0
      %398 = vmatprep.subr.bf16.mxu0 0
      %399 = vmatpush2.bf16.msra.mxu0 0
      %400 = vmatprep.subr.bf16.mxu0 0
      %401 = vmatpush2.bf16.msra.mxu0 0
      %402 = vmatprep.subr.bf16.mxu0 0
      %403 = vmatpush2.bf16.msra.mxu0 0
      %404 = vmatprep.subr.bf16.mxu0 0
      %405 = vmatpush2.bf16.msra.mxu0 0
      %406 = vmatprep.subr.bf16.mxu0 0
      %407 = vmatpush2.bf16.msra.mxu0 0
      %408 = vmatprep.subr.bf16.mxu0 0
      %409 = vmatpush2.bf16.msra.mxu0 0
      %410 = vmatprep.mubr.bf16.mxu0 0
      %411 = vmatmul.mubr.bf16.gmra.mxu0 %v376
      %v412 = vpop.f32.mrf.mxu0
      %v413 = vadd.f32 %v362, %v412
      %v414 = vpop.f32.mrf.mxu0
      %v415 = vpop.f32.mrf.mxu0
      %v416 = vpop.f32.mrf.mxu0
      %417 = vdwg.mxu0
      %v418 = vld [vmem:[%s2 + $0x38] sm:$0xf]
      %v419 = vld [vmem:[%s2 + $0x3c] sm:$0xf]
      %v420 = vld [vmem:[%s2 + $0x40] sm:$0xf]
      %v421 = vld [vmem:[%s2 + $0x44] sm:$0xf]
      %v422 = vpack.c.bf16 %v204, %v204
      %v423 = vld [vmem:[%s3 + $0x3] sm:$0x1]
      %v424 = vlaneseq
      %v425 = vshrl.u32 %v424, 7
      %v426 = vsub.s32 0, %v425
      %v427 = vrot.slane %v423, %v426
      %429 = vrot.lane.b32.xlu0 %v422, 96
      %v430 = vpop.permute.xlu0 %429
      %v435 = vunpack.c.l.b16 %v418
      %v436 = vunpack.c.l.b16 %v419
      %v437 = vunpack.c.l.b16 %v420
      %v438 = vunpack.c.l.b16 %v421
      %v439 = vpack.c.b16 %v436, %v435
      %v440 = vpack.c.b16 %v438, %v437
      %v444 = vsel %vm308, %v430, 0
      %446 = vmatprep.subr.bf16.mxu0 0
      %447 = vmatpush1.bf16.msra.mxu0 0
      %448 = vmatprep.subr.bf16.mxu0 0
      %449 = vmatpush1.bf16.msra.mxu0 0
      %450 = vmatprep.subr.bf16.mxu0 0
      %451 = vmatpush1.bf16.msra.mxu0 0
      %452 = vmatprep.subr.bf16.mxu0 0
      %453 = vmatpush1.bf16.msra.mxu0 0
      %454 = vmatprep.subr.bf16.mxu0 0
      %455 = vmatpush1.bf16.msra.mxu0 0
      %456 = vmatprep.subr.bf16.mxu0 0
      %457 = vmatpush1.bf16.msra.mxu0 0
      %458 = vmatprep.subr.bf16.mxu0 0
      %459 = vmatpush1.bf16.msra.mxu0 %v440
      %460 = vmatprep.subr.bf16.mxu0 0
      %461 = vmatpush1.bf16.msra.mxu0 %v439
      %462 = vmatprep.subr.bf16.mxu0 0
      %463 = vmatpush2.bf16.msra.mxu0 0
      %464 = vmatprep.subr.bf16.mxu0 0
      %465 = vmatpush2.bf16.msra.mxu0 0
      %466 = vmatprep.subr.bf16.mxu0 0
      %467 = vmatpush2.bf16.msra.mxu0 0
      %468 = vmatprep.subr.bf16.mxu0 0
      %469 = vmatpush2.bf16.msra.mxu0 0
      %470 = vmatprep.subr.bf16.mxu0 0
      %471 = vmatpush2.bf16.msra.mxu0 0
      %472 = vmatprep.subr.bf16.mxu0 0
      %473 = vmatpush2.bf16.msra.mxu0 0
      %474 = vmatprep.subr.bf16.mxu0 0
      %475 = vmatpush2.bf16.msra.mxu0 0
      %476 = vmatprep.subr.bf16.mxu0 0
      %477 = vmatpush2.bf16.msra.mxu0 0
      %478 = vmatprep.mubr.bf16.mxu0 0
      %479 = vmatmul.mubr.bf16.gmra.mxu0 %v444
      %v480 = vpop.f32.mrf.mxu0
      %v481 = vadd.f32 %v427, %v480
      %v482 = vpop.f32.mrf.mxu0
      %v483 = vpop.f32.mrf.mxu0
      %v484 = vpop.f32.mrf.mxu0
      %485 = vdwg.mxu0
      %v486 = vadd.f32 %v413, %v481
      %v487 = vxor.u32 %v486, 2147483648
      %v488 = vmul.f32 %v487, 1.442695
      %v489 = vpow.pop %v488
      %v490 = vadd.f32 %v489, 1.0
      %v491 = vrcp.pop %v490
      %v492 = vmul.f32 1.0, %v491
      %494 = vrot.lane.b32.xlu0 %v481, 64
      %v495 = vpop.permute.xlu0 %494
      %v497 = vmul.f32 %v492, %v495
      %499 = vrot.lane.b32.xlu0 %v497, 64
      %v500 = vpop.permute.xlu0 %499
      %v502 = vadd.f32 %v413, %v500
      %v503 = vtanh.pop %v502
      %v504 = vsub.f32 1.0, %v492
      %506 = vrot.lane.b32.xlu0 %v503, 96
      %v507 = vpop.permute.xlu0 %506
      %v509 = vmul.f32 %v504, %v507
      %v510 = vmul.f32 %v492, %v204
      %v511 = vadd.f32 %v509, %v510
      %513 = vrot.lane.b32.xlu0 %v511, 96
      %v514 = vpop.permute.xlu0 %513
      %517 = vrot.lane.b32.xlu0 %v203, 24
      %v518 = vpop.permute.xlu0 %517
      %v520 = vsel %vm308, %v514, %v518
      %v521 = vld [vmem:[%s2 + $0x48] sm:$0xf]
      %v522 = vld [vmem:[%s2 + $0x4c] sm:$0xf]
      %v523 = vld [vmem:[%s2 + $0x50] sm:$0xf]
      %v524 = vld [vmem:[%s2 + $0x54] sm:$0xf]
      %v525 = vld [vmem:[%s2 + $0x58] sm:$0xf]
      %v526 = vld [vmem:[%s2 + $0x5c] sm:$0xf]
      %v527 = vld [vmem:[%s2 + $0x60] sm:$0xf]
      %v528 = vpack.c.bf16 %v520, %v520
      %v529 = vld [vmem:[%s3 + $0x4] sm:$0x1]
      %v530 = vlaneseq
      %v531 = vshrl.u32 %v530, 7
      %v532 = vsub.s32 0, %v531
      %v533 = vrot.slane %v529, %v532
      %v541 = vunpack.c.l.b16 %v521
      %v542 = vunpack.c.l.b16 %v522
      %v543 = vunpack.c.l.b16 %v523
      %v544 = vunpack.c.l.b16 %v524
      %v545 = vunpack.c.l.b16 %v525
      %v546 = vunpack.c.l.b16 %v526
      %v547 = vunpack.c.l.b16 %v527
      %v548 = vpack.c.b16 %v542, %v541
      %v549 = vpack.c.b16 %v544, %v543
      %v550 = vpack.c.b16 %v546, %v545
      %v551 = vpack.c.b16 %v547, %v547
      %vm555 = vcmask 457728
      %v557 = vsel %vm555, %v528, 0
      %v560 = vsel %vm241, %v551, 0
      %562 = vmatprep.subr.bf16.mxu0 0
      %563 = vmatpush1.bf16.msra.mxu0 0
      %564 = vmatprep.subr.bf16.mxu0 0
      %565 = vmatpush1.bf16.msra.mxu0 0
      %566 = vmatprep.subr.bf16.mxu0 0
      %567 = vmatpush1.bf16.msra.mxu0 0
      %568 = vmatprep.subr.bf16.mxu0 0
      %569 = vmatpush1.bf16.msra.mxu0 0
      %570 = vmatprep.subr.bf16.mxu0 0
      %571 = vmatpush1.bf16.msra.mxu0 %v560
      %572 = vmatprep.subr.bf16.mxu0 0
      %573 = vmatpush1.bf16.msra.mxu0 %v550
      %574 = vmatprep.subr.bf16.mxu0 0
      %575 = vmatpush1.bf16.msra.mxu0 %v549
      %576 = vmatprep.subr.bf16.mxu0 0
      %577 = vmatpush1.bf16.msra.mxu0 %v548
      %578 = vmatprep.subr.bf16.mxu0 0
      %579 = vmatpush2.bf16.msra.mxu0 0
      %580 = vmatprep.subr.bf16.mxu0 0
      %581 = vmatpush2.bf16.msra.mxu0 0
      %582 = vmatprep.subr.bf16.mxu0 0
      %583 = vmatpush2.bf16.msra.mxu0 0
      %584 = vmatprep.subr.bf16.mxu0 0
      %585 = vmatpush2.bf16.msra.mxu0 0
      %586 = vmatprep.subr.bf16.mxu0 0
      %587 = vmatpush2.bf16.msra.mxu0 0
      %588 = vmatprep.subr.bf16.mxu0 0
      %589 = vmatpush2.bf16.msra.mxu0 0
      %590 = vmatprep.subr.bf16.mxu0 0
      %591 = vmatpush2.bf16.msra.mxu0 0
      %592 = vmatprep.subr.bf16.mxu0 0
      %593 = vmatpush2.bf16.msra.mxu0 0
      %594 = vmatprep.mubr.bf16.mxu0 0
      %595 = vmatmul.mubr.bf16.gmra.mxu0 %v557
      %v596 = vpop.f32.mrf.mxu0
      %v597 = vadd.f32 %v533, %v596
      %v598 = vpop.f32.mrf.mxu0
      %v599 = vpop.f32.mrf.mxu0
      %v600 = vpop.f32.mrf.mxu0
      %601 = vdwg.mxu0
      %v602 = vmax.f32 %v597, 0.0
      %v603 = vld [vmem:[%s2 + $0x68] sm:$0xf]
      %v604 = vld [vmem:[%s2 + $0x6c] sm:$0xf]
      %v605 = vld [vmem:[%s2 + $0x70] sm:$0xf]
      %v606 = vld [vmem:[%s2 + $0x74] sm:$0xf]
      %v607 = vld [vmem:[%s2 + $0x78] sm:$0xf]
      %v608 = vld [vmem:[%s2 + $0x7c] sm:$0xf]
      %v609 = vld [vmem:[%s2 + $0x80] sm:$0xf]
      %v610 = vld [vmem:[%s2 + $0x84] sm:$0xf]
      %v611 = vpack.c.bf16 %v602, %v602
      %v612 = vld [vmem:[%s3 + $0x5] sm:$0x1]
      %v613 = vlaneseq
      %v614 = vshrl.u32 %v613, 7
      %v615 = vsub.s32 0, %v614
      %v616 = vrot.slane %v612, %v615
      %v625 = vunpack.c.l.b16 %v603
      %v626 = vunpack.c.l.b16 %v604
      %v627 = vunpack.c.l.b16 %v605
      %v628 = vunpack.c.l.b16 %v606
      %v629 = vunpack.c.l.b16 %v607
      %v630 = vunpack.c.l.b16 %v608
      %v631 = vunpack.c.l.b16 %v609
      %v632 = vunpack.c.l.b16 %v610
      %v633 = vpack.c.b16 %v626, %v625
      %v634 = vpack.c.b16 %v628, %v627
      %v635 = vpack.c.b16 %v630, %v629
      %v636 = vpack.c.b16 %v632, %v631
      %vm641 = vcmask 523264
      %v643 = vsel %vm641, %v611, 0
      %645 = vmatprep.subr.bf16.mxu0 0
      %646 = vmatpush1.bf16.msra.mxu0 0
      %647 = vmatprep.subr.bf16.mxu0 0
      %648 = vmatpush1.bf16.msra.mxu0 0
      %649 = vmatprep.subr.bf16.mxu0 0
      %650 = vmatpush1.bf16.msra.mxu0 0
      %651 = vmatprep.subr.bf16.mxu0 0
      %652 = vmatpush1.bf16.msra.mxu0 0
      %653 = vmatprep.subr.bf16.mxu0 0
      %654 = vmatpush1.bf16.msra.mxu0 %v636
      %655 = vmatprep.subr.bf16.mxu0 0
      %656 = vmatpush1.bf16.msra.mxu0 %v635
      %657 = vmatprep.subr.bf16.mxu0 0
      %658 = vmatpush1.bf16.msra.mxu0 %v634
      %659 = vmatprep.subr.bf16.mxu0 0
      %660 = vmatpush1.bf16.msra.mxu0 %v633
      %661 = vmatprep.subr.bf16.mxu0 0
      %662 = vmatpush2.bf16.msra.mxu0 0
      %663 = vmatprep.subr.bf16.mxu0 0
      %664 = vmatpush2.bf16.msra.mxu0 0
      %665 = vmatprep.subr.bf16.mxu0 0
      %666 = vmatpush2.bf16.msra.mxu0 0
      %667 = vmatprep.subr.bf16.mxu0 0
      %668 = vmatpush2.bf16.msra.mxu0 0
      %669 = vmatprep.subr.bf16.mxu0 0
      %670 = vmatpush2.bf16.msra.mxu0 0
      %671 = vmatprep.subr.bf16.mxu0 0
      %672 = vmatpush2.bf16.msra.mxu0 0
      %673 = vmatprep.subr.bf16.mxu0 0
      %674 = vmatpush2.bf16.msra.mxu0 0
      %675 = vmatprep.subr.bf16.mxu0 0
      %676 = vmatpush2.bf16.msra.mxu0 0
      %677 = vmatprep.mubr.bf16.mxu0 0
      %678 = vmatmul.mubr.bf16.gmra.mxu0 %v643
      %v679 = vpop.f32.mrf.mxu0
      %v680 = vadd.f32 %v616, %v679
      %v681 = vpop.f32.mrf.mxu0
      %v682 = vpop.f32.mrf.mxu0
      %v683 = vpop.f32.mrf.mxu0
      %684 = vdwg.mxu0
      %685 = vrot.lane.b32.xlu0 %v203, 96
      %v686 = vpop.permute.xlu0 %685
      %v688 = vadd.f32 %v680, %v686
      %v689 = vlaneseq
      %v690 = vand.u32 %v689, 127
      %vm691 = vcmp.ge.s32.totalorder %v690, 0
      %vm692 = vcmp.lt.s32.totalorder %v690, 8
      %vm693 = vmand %vm691, %vm692
      %v694 = vsel %vm693, %v688, -1e+30
      %v695 = vsel %vm641, %v694, -inf
      %696 = vmax.xlane.f32.xlu0 %v695
      %v697 = vpop.xlane.xlu0 %696
      %vm698 = vcmp.ge.f32.partialorder %v694, %v697
      %vm699 = vmand %vm698, %vm693
      %v700 = vsel %vm699, %v690, 64
      %v701 = vsel %vm641, %v700, 2147483647
      %v702 = vand.u32 %v701, 65535
      %v703 = vshra.s32 %v701, 16
      %v704 = vcvt.s32.f32 %v702
      %v705 = vcvt.s32.f32 %v703
      %706 = vmin.xlane.f32.xlu0 %v705
      %v707 = vpop.xlane.xlu0 %706
      %vm708 = vcmp.eq.f32.partialorder %v705, %v707
      %v709 = vsel %vm708, %v704, inf
      %710 = vmin.xlane.f32.xlu0 %v709
      %v711 = vpop.xlane.xlu0 %710
      %v712 = vcvt.f32.s32 %v711
      %v713 = vcvt.f32.s32 %v707
      %v714 = vshll.u32 %v713, 16
      %v715 = vadd.s32 %v714, %v712
      %vm716 = vcmp.eq.s32.totalorder %v690, %v715
      %v717 = vsel %vm716, 1, 0
      %v718 = vcvt.s32.f32 %v717
      %v719 = vadd.f32 %v718, 0.0
      %vm720 = vcmp.ge.s32.totalorder %v690, 8
      %vm721 = vcmp.lt.s32.totalorder %v690, 16
      %vm722 = vmand %vm720, %vm721
      %v723 = vsel %vm722, %v688, -1e+30
      %v724 = vsel %vm641, %v723, -inf
      %725 = vmax.xlane.f32.xlu0 %v724
      %v726 = vpop.xlane.xlu0 %725
      %vm727 = vcmp.ge.f32.partialorder %v723, %v726
      %vm728 = vmand %vm727, %vm722
      %v729 = vsel %vm728, %v690, 64
      %v730 = vsel %vm641, %v729, 2147483647
      %v731 = vand.u32 %v730, 65535
      %v732 = vshra.s32 %v730, 16
      %v733 = vcvt.s32.f32 %v731
      %v734 = vcvt.s32.f32 %v732
      %735 = vmin.xlane.f32.xlu0 %v734
      %v736 = vpop.xlane.xlu0 %735
      %vm737 = vcmp.eq.f32.partialorder %v734, %v736
      %v738 = vsel %vm737, %v733, inf
      %739 = vmin.xlane.f32.xlu0 %v738
      %v740 = vpop.xlane.xlu0 %739
      %v741 = vcvt.f32.s32 %v740
      %v742 = vcvt.f32.s32 %v736
      %v743 = vshll.u32 %v742, 16
      %v744 = vadd.s32 %v743, %v741
      %vm745 = vcmp.eq.s32.totalorder %v690, %v744
      %v746 = vsel %vm745, 1, 0
      %v747 = vcvt.s32.f32 %v746
      %v748 = vadd.f32 %v719, %v747
      %vm749 = vcmp.ge.s32.totalorder %v690, 16
      %vm750 = vcmp.lt.s32.totalorder %v690, 24
      %vm751 = vmand %vm749, %vm750
      %v752 = vsel %vm751, %v688, -1e+30
      %v753 = vsel %vm641, %v752, -inf
      %754 = vmax.xlane.f32.xlu0 %v753
      %v755 = vpop.xlane.xlu0 %754
      %vm756 = vcmp.ge.f32.partialorder %v752, %v755
      %vm757 = vmand %vm756, %vm751
      %v758 = vsel %vm757, %v690, 64
      %v759 = vsel %vm641, %v758, 2147483647
      %v760 = vand.u32 %v759, 65535
      %v761 = vshra.s32 %v759, 16
      %v762 = vcvt.s32.f32 %v760
      %v763 = vcvt.s32.f32 %v761
      %764 = vmin.xlane.f32.xlu0 %v763
      %v765 = vpop.xlane.xlu0 %764
      %vm766 = vcmp.eq.f32.partialorder %v763, %v765
      %v767 = vsel %vm766, %v762, inf
      %768 = vmin.xlane.f32.xlu0 %v767
      %v769 = vpop.xlane.xlu0 %768
      %v770 = vcvt.f32.s32 %v769
      %v771 = vcvt.f32.s32 %v765
      %v772 = vshll.u32 %v771, 16
      %v773 = vadd.s32 %v772, %v770
      %vm774 = vcmp.eq.s32.totalorder %v690, %v773
      %v775 = vsel %vm774, 1, 0
      %v776 = vcvt.s32.f32 %v775
      %v777 = vadd.f32 %v748, %v776
      %vm778 = vcmp.ge.s32.totalorder %v690, 24
      %vm779 = vcmp.lt.s32.totalorder %v690, 32
      %vm780 = vmand %vm778, %vm779
      %v781 = vsel %vm780, %v688, -1e+30
      %v782 = vsel %vm641, %v781, -inf
      %783 = vmax.xlane.f32.xlu0 %v782
      %v784 = vpop.xlane.xlu0 %783
      %vm785 = vcmp.ge.f32.partialorder %v781, %v784
      %vm786 = vmand %vm785, %vm780
      %v787 = vsel %vm786, %v690, 64
      %v788 = vsel %vm641, %v787, 2147483647
      %v789 = vand.u32 %v788, 65535
      %v790 = vshra.s32 %v788, 16
      %v791 = vcvt.s32.f32 %v789
      %v792 = vcvt.s32.f32 %v790
      %793 = vmin.xlane.f32.xlu0 %v792
      %v794 = vpop.xlane.xlu0 %793
      %vm795 = vcmp.eq.f32.partialorder %v792, %v794
      %v796 = vsel %vm795, %v791, inf
      %797 = vmin.xlane.f32.xlu0 %v796
      %v798 = vpop.xlane.xlu0 %797
      %v799 = vcvt.f32.s32 %v798
      %v800 = vcvt.f32.s32 %v794
      %v801 = vshll.u32 %v800, 16
      %v802 = vadd.s32 %v801, %v799
      %vm803 = vcmp.eq.s32.totalorder %v690, %v802
      %v804 = vsel %vm803, 1, 0
      %v805 = vcvt.s32.f32 %v804
      %v806 = vadd.f32 %v777, %v805
      %vm807 = vcmp.ge.s32.totalorder %v690, 32
      %vm808 = vcmp.lt.s32.totalorder %v690, 40
      %vm809 = vmand %vm807, %vm808
      %v810 = vsel %vm809, %v688, -1e+30
      %v811 = vsel %vm641, %v810, -inf
      %812 = vmax.xlane.f32.xlu0 %v811
      %v813 = vpop.xlane.xlu0 %812
      %vm814 = vcmp.ge.f32.partialorder %v810, %v813
      %vm815 = vmand %vm814, %vm809
      %v816 = vsel %vm815, %v690, 64
      %v817 = vsel %vm641, %v816, 2147483647
      %v818 = vand.u32 %v817, 65535
      %v819 = vshra.s32 %v817, 16
      %v820 = vcvt.s32.f32 %v818
      %v821 = vcvt.s32.f32 %v819
      %822 = vmin.xlane.f32.xlu0 %v821
      %v823 = vpop.xlane.xlu0 %822
      %vm824 = vcmp.eq.f32.partialorder %v821, %v823
      %v825 = vsel %vm824, %v820, inf
      %826 = vmin.xlane.f32.xlu0 %v825
      %v827 = vpop.xlane.xlu0 %826
      %v828 = vcvt.f32.s32 %v827
      %v829 = vcvt.f32.s32 %v823
      %v830 = vshll.u32 %v829, 16
      %v831 = vadd.s32 %v830, %v828
      %vm832 = vcmp.eq.s32.totalorder %v690, %v831
      %v833 = vsel %vm832, 1, 0
      %v834 = vcvt.s32.f32 %v833
      %v835 = vadd.f32 %v806, %v834
      %vm836 = vcmp.ge.s32.totalorder %v690, 40
      %vm837 = vcmp.lt.s32.totalorder %v690, 48
      %vm838 = vmand %vm836, %vm837
      %v839 = vsel %vm838, %v688, -1e+30
      %v840 = vsel %vm641, %v839, -inf
      %841 = vmax.xlane.f32.xlu0 %v840
      %v842 = vpop.xlane.xlu0 %841
      %vm843 = vcmp.ge.f32.partialorder %v839, %v842
      %vm844 = vmand %vm843, %vm838
      %v845 = vsel %vm844, %v690, 64
      %v846 = vsel %vm641, %v845, 2147483647
      %v847 = vand.u32 %v846, 65535
      %v848 = vshra.s32 %v846, 16
      %v849 = vcvt.s32.f32 %v847
      %v850 = vcvt.s32.f32 %v848
      %851 = vmin.xlane.f32.xlu0 %v850
      %v852 = vpop.xlane.xlu0 %851
      %vm853 = vcmp.eq.f32.partialorder %v850, %v852
      %v854 = vsel %vm853, %v849, inf
      %855 = vmin.xlane.f32.xlu0 %v854
      %v856 = vpop.xlane.xlu0 %855
      %v857 = vcvt.f32.s32 %v856
      %v858 = vcvt.f32.s32 %v852
      %v859 = vshll.u32 %v858, 16
      %v860 = vadd.s32 %v859, %v857
      %vm861 = vcmp.eq.s32.totalorder %v690, %v860
      %v862 = vsel %vm861, 1, 0
      %v863 = vcvt.s32.f32 %v862
      %v864 = vadd.f32 %v835, %v863
      %vm865 = vcmp.ge.s32.totalorder %v690, 48
      %vm866 = vcmp.lt.s32.totalorder %v690, 56
      %vm867 = vmand %vm865, %vm866
      %v868 = vsel %vm867, %v688, -1e+30
      %v869 = vsel %vm641, %v868, -inf
      %870 = vmax.xlane.f32.xlu0 %v869
      %v871 = vpop.xlane.xlu0 %870
      %vm872 = vcmp.ge.f32.partialorder %v868, %v871
      %vm873 = vmand %vm872, %vm867
      %v874 = vsel %vm873, %v690, 64
      %v875 = vsel %vm641, %v874, 2147483647
      %v876 = vand.u32 %v875, 65535
      %v877 = vshra.s32 %v875, 16
      %v878 = vcvt.s32.f32 %v876
      %v879 = vcvt.s32.f32 %v877
      %880 = vmin.xlane.f32.xlu0 %v879
      %v881 = vpop.xlane.xlu0 %880
      %vm882 = vcmp.eq.f32.partialorder %v879, %v881
      %v883 = vsel %vm882, %v878, inf
      %884 = vmin.xlane.f32.xlu0 %v883
      %v885 = vpop.xlane.xlu0 %884
      %v886 = vcvt.f32.s32 %v885
      %v887 = vcvt.f32.s32 %v881
      %v888 = vshll.u32 %v887, 16
      %v889 = vadd.s32 %v888, %v886
      %vm890 = vcmp.eq.s32.totalorder %v690, %v889
      %v891 = vsel %vm890, 1, 0
      %v892 = vcvt.s32.f32 %v891
      %v893 = vadd.f32 %v864, %v892
      %vm894 = vcmp.ge.s32.totalorder %v690, 56
      %vm895 = vcmp.lt.s32.totalorder %v690, 64
      %vm896 = vmand %vm894, %vm895
      %v897 = vsel %vm896, %v688, -1e+30
      %v898 = vsel %vm641, %v897, -inf
      %899 = vmax.xlane.f32.xlu0 %v898
      %v900 = vpop.xlane.xlu0 %899
      %vm901 = vcmp.ge.f32.partialorder %v897, %v900
      %vm902 = vmand %vm901, %vm896
      %v903 = vsel %vm902, %v690, 64
      %v904 = vsel %vm641, %v903, 2147483647
      %v905 = vand.u32 %v904, 65535
      %v906 = vshra.s32 %v904, 16
      %v907 = vcvt.s32.f32 %v905
      %v908 = vcvt.s32.f32 %v906
      %909 = vmin.xlane.f32.xlu0 %v908
      %v910 = vpop.xlane.xlu0 %909
      %vm911 = vcmp.eq.f32.partialorder %v908, %v910
      %v912 = vsel %vm911, %v907, inf
      %913 = vmin.xlane.f32.xlu0 %v912
      %v914 = vpop.xlane.xlu0 %913
      %v915 = vcvt.f32.s32 %v914
      %v916 = vcvt.f32.s32 %v910
      %v917 = vshll.u32 %v916, 16
      %v918 = vadd.s32 %v917, %v915
      %vm919 = vcmp.eq.s32.totalorder %v690, %v918
      %v920 = vsel %vm919, 1, 0
      %v921 = vcvt.s32.f32 %v920
      %v922 = vadd.f32 %v893, %v921
      %924 = vrot.lane.b32.xlu0 %v922, 96
      %v925 = vpop.permute.xlu0 %924
      %v927 = vsel %vm308, %v925, %v511
      %928 = vst.msk [vmem:[#allocation2] sm:$0xff] %vm641, %v927
      %929 = vrot.lane.b32.xlu0 %v511, 32
      %v930 = vpop.permute.xlu0 %929
      %v932 = vsel %vm641, %v680, %v930
      %vm933 = vcmask 785408
      %v934 = vsel %vm933, %v932, %v925
      %v935 = vsel %vm308, %v925, 0.0
      %936 = vst [vmem:[%s194] sm:$0xff] %v934
      %937 = vst [vmem:[%s194 + $0x8] sm:$0xff] %v935
      %p938 = scmp.lt.s32.totalorder %s15, 7
      %s939 = scalar_select %p938, %s15, 7
      %s940 = smul.addr %s939, 2
      %s941 = smul.addr %s940, 8
      %s942 = scalar_lea.vmem %s4, %s941
      // Predicated region
      $region41: #{rssm_rollout.1} parent=35 // pred_check
        %p943 = pneg %p122
      $region42: #{rssm_rollout.1} parent=35 // pred_check_branch
        %945 = sbr.rel (%p943) target = $region44
      $region43: #{rssm_rollout.1} parent=35 // pred_region
        _
      $region44: #{rssm_rollout.1} parent=35 // pred_fallthru
        _
    $region36: #{rssm_rollout.1} parent=5 // pred_fallthru
      _
    %p946 = scmp.le.s32.totalorder 2, %s10
    // Predicated region
    $region45: #{rssm_rollout.1} parent=5 // pred_check
      %p947 = pneg %p946
    $region46: #{rssm_rollout.1} parent=5 // pred_check_branch
      %949 = sbr.rel (%p947) target = $region48
    $region47: #{rssm_rollout.1} parent=5 // pred_region
      %s950 = ssub.s32 %s10, 2
      // Predicated region
      $region49: #{rssm_rollout.1} parent=47 // pred_check
        %p951 = pneg %p128
      $region50: #{rssm_rollout.1} parent=47 // pred_check_branch
        %953 = sbr.rel (%p951) target = $region52
      $region51: #{rssm_rollout.1} parent=47 // pred_region
        %p954 = scmp.lt.s32.totalorder %s16, 7
        %s955 = scalar_select %p954, %s16, 7
        %s956 = smul.addr %s955, 2
        %s957 = smul.addr %s956, 8
        %s958 = scalar_lea.vmem %s4, %s957
      $region52: #{rssm_rollout.1} parent=47 // pred_fallthru
        _
    $region48: #{rssm_rollout.1} parent=5 // pred_fallthru
      _
  $region6: #{rssm_rollout.1} parent=0 // loop_footer
    %s14 = sadd.s32 1, %s10
  $region7: #{rssm_rollout.1} parent=0 // loop_footer_branch
    %9 = sbr.rel target = $region3
  $region8: #{rssm_rollout.1} parent=0 // loop_exit
    _

</llo_original>
